<compile_context>
chip_gen: v7x
topology: tpu7x:2x2x1
jax: 0.10.0
libtpu: 0.0.40
codegen_flags: <defaults>
</compile_context>

<pallas_src>
import jax
import jax.numpy as jnp
from jax.experimental import pallas as pl
from jax.experimental.pallas import tpu as pltpu

HIDDEN = 32
NUM_LAYERS = 2
SUBLANE = 8


def _rnn_kernel(x_ref, h0_ref, wih0_ref, whh0_ref, b0_ref,
                w1cat_ref, b1_ref, wout_ref, bout_ref,
                outs_ref, hn_ref,
                xw0_sc, h1_sc, cat_sc, hseq_sc):
    """Whole-sequence 2-layer Elman RNN + Linear head in one kernel call."""
    SB, _ = x_ref.shape
    _, Bp, H = h0_ref.shape
    S = SB // Bp

    # Hoisted layer-0 input projection for every timestep (one MXU matmul),
    # with both layer-0 biases folded in: rows are indexed as t*Bp + b.
    xw0_sc[...] = (
        jnp.dot(x_ref[...], wih0_ref[...], preferred_element_type=jnp.float32)
        + b0_ref[...])

    # Initialize recurrent carries from h_0.  cat_sc holds the fused layer-1
    # matmul operand [h1_t | h2_{t-1}] of shape (Bp, 2H).
    h1_sc[...] = h0_ref[0].astype(jnp.float32)
    cat_sc[:, pl.ds(H, H)] = h0_ref[1].astype(jnp.float32)

    def step(t, carry):
        row = pl.multiple_of(t * Bp, SUBLANE)

        # Layer 0: h1_t = tanh(x_t W_ih0^T + b0 + h1_{t-1} W_hh0^T)
        h1 = jnp.tanh(
            xw0_sc[pl.ds(row, Bp), :]
            + jnp.dot(h1_sc[...], whh0_ref[...],
                      preferred_element_type=jnp.float32))
        h1_sc[...] = h1

        # Layer 1 (fused): [h1_t | h2_{t-1}] @ [W_ih1^T ; W_hh1^T], K = 2H.
        cat_sc[:, pl.ds(0, H)] = h1
        h2 = jnp.tanh(
            jnp.dot(cat_sc[...], w1cat_ref[...],
                    preferred_element_type=jnp.float32)
            + b1_ref[...])
        cat_sc[:, pl.ds(H, H)] = h2

        # Stash layer-1 hidden for the batched output head.
        hseq_sc[pl.ds(row, Bp), :] = h2
        return carry

    jax.lax.fori_loop(0, S, step, 0, unroll=True)

    # Linear(32 -> 1) head for all timesteps at once: elementwise mul + lane
    # reduction (XLU), single store (no per-step tiny stores).
    y = (jnp.sum(hseq_sc[...] * wout_ref[...], axis=-1, keepdims=True)
         + bout_ref[...])
    outs_ref[...] = y.astype(outs_ref.dtype)

    # Final hidden states -> h_n.
    hn_ref[0] = h1_sc[...].astype(hn_ref.dtype)
    hn_ref[1] = cat_sc[:, pl.ds(H, H)].astype(hn_ref.dtype)


def _full_spec(shape):
    # Whole-array block, resident for the single grid step.
    return pl.BlockSpec(shape, lambda i: (0,) * len(shape))


@jax.jit
def rnn_forward(x, h0, params):
    """Equivalent of Rnn.forward: returns (stacked_outs (B,S,1), h_n (2,B,H))."""
    B, S, In = x.shape
    H = HIDDEN
    Bp = ((B + SUBLANE - 1) // SUBLANE) * SUBLANE   # sublane-aligned batch

    # Pad the batch so every per-step slice of the time-major slab is an
    # aligned sublane tile.  Padded rows carry garbage but never mix with the
    # real rows (the recurrence is independent per batch row); we slice them
    # off after the call.
    x_p = jnp.pad(x, ((0, Bp - B), (0, 0), (0, 0)))
    h0_p = jnp.pad(h0, ((0, 0), (0, Bp - B), (0, 0)))

    # Time-major, flattened over (t, b): row index = t*Bp + b.
    x_tm = jnp.transpose(x_p, (1, 0, 2)).reshape(S * Bp, In)

    # Pre-transpose weights for row-major matmuls, fold each layer's two bias
    # vectors together, and concatenate layer-1 weights so the recurrence
    # needs a single (Bp,2H)@(2H,H) matmul per step.
    wih0_t = params["w_ih_l0"].T                      # (In, H)
    whh0_t = params["w_hh_l0"].T                      # (H, H)
    b0 = (params["b_ih_l0"] + params["b_hh_l0"]).reshape(1, H)
    w1cat = jnp.concatenate(
        [params["w_ih_l1"].T, params["w_hh_l1"].T], axis=0)   # (2H, H)
    b1 = (params["b_ih_l1"] + params["b_hh_l1"]).reshape(1, H)
    wout = params["w_out"].reshape(1, H)              # Linear(32, 1) weight
    bout = params["b_out"].reshape(1, 1)

    out_shapes = (
        jax.ShapeDtypeStruct((S * Bp, 1), x.dtype),           # outs (time-major flat)
        jax.ShapeDtypeStruct((NUM_LAYERS, Bp, H), x.dtype),   # h_n (padded batch)
    )

    grid_spec = pltpu.PrefetchScalarGridSpec(
        num_scalar_prefetch=0,
        grid=(1,),                                            # single invocation
        in_specs=[
            _full_spec((S * Bp, In)),                         # x (projected in-kernel)
            _full_spec((NUM_LAYERS, Bp, H)),                  # h_0
            _full_spec((In, H)), _full_spec((H, H)), _full_spec((1, H)),
            _full_spec((2 * H, H)), _full_spec((1, H)),
            _full_spec((1, H)), _full_spec((1, 1)),
        ],
        out_specs=[
            _full_spec((S * Bp, 1)),
            _full_spec((NUM_LAYERS, Bp, H)),
        ],
        scratch_shapes=[
            pltpu.VMEM((S * Bp, H), jnp.float32),   # hoisted input projection
            pltpu.VMEM((Bp, H), jnp.float32),       # layer-0 hidden carry
            pltpu.VMEM((Bp, 2 * H), jnp.float32),   # fused layer-1 operand [h1|h2]
            pltpu.VMEM((S * Bp, H), jnp.float32),   # layer-1 hiddens (for head)
        ],
    )

    outs_flat, h_n_p = pl.pallas_call(
        _rnn_kernel,
        out_shape=out_shapes,
        grid_spec=grid_spec,
        compiler_params=pltpu.CompilerParams(
            dimension_semantics=("arbitrary",)),   # recurrence is sequential
    )(x_tm, h0_p, wih0_t, whh0_t, b0, w1cat, b1, wout, bout)

    outs = jnp.transpose(outs_flat.reshape(S, Bp, 1)[:, :B], (1, 0, 2))  # (B,S,1)
    h_n = h_n_p[:, :B]                                                   # (2,B,H)
    return outs, h_n


def rnn_reference(x, h0, params):
    """Pure-JAX reference matching torch.nn.RNN(num_layers=2, batch_first=True)."""
    def step(carry, x_t):
        h1, h2 = carry
        h1n = jnp.tanh(x_t @ params["w_ih_l0"].T + params["b_ih_l0"]
                       + h1 @ params["w_hh_l0"].T + params["b_hh_l0"])
        h2n = jnp.tanh(h1n @ params["w_ih_l1"].T + params["b_ih_l1"]
                       + h2 @ params["w_hh_l1"].T + params["b_hh_l1"])
        y = h2n @ params["w_out"].T + params["b_out"]
        return (h1n, h2n), y

    (h1f, h2f), ys = jax.lax.scan(step, (h0[0], h0[1]),
                                  jnp.transpose(x, (1, 0, 2)))
    outs = jnp.transpose(ys, (1, 0, 2))               # (B, S, 1)
    h_n = jnp.stack([h1f, h2f], axis=0)               # (2, B, H)
    return outs, h_n


def init_params(key, input_size, hidden):
    # PyTorch default init: U(-1/sqrt(H), 1/sqrt(H)) for all RNN / Linear params.
    k = 1.0 / jnp.sqrt(jnp.float32(hidden))
    names_shapes = [
        ("w_ih_l0", (hidden, input_size)),
        ("w_hh_l0", (hidden, hidden)),
        ("b_ih_l0", (hidden,)),
        ("b_hh_l0", (hidden,)),
        ("w_ih_l1", (hidden, hidden)),
        ("w_hh_l1", (hidden, hidden)),
        ("b_ih_l1", (hidden,)),
        ("b_hh_l1", (hidden,)),
        ("w_out", (1, hidden)),
        ("b_out", (1,)),
    ]
    params = {}
    keys = jax.random.split(key, len(names_shapes))
    for sub, (name, shape) in zip(keys, names_shapes):
        params[name] = jax.random.uniform(sub, shape, jnp.float32, -k, k)
    return params


if __name__ == "__main__":
    B, S, IN = 2, 8, 4   # batch=2, seq=8, input_size=4, hidden=32 (fixed)

    root = jax.random.PRNGKey(0)
    k_x, k_h, k_p = jax.random.split(root, 3)
    x = jax.random.normal(k_x, (B, S, IN), jnp.float32)
    h0 = jax.random.normal(k_h, (NUM_LAYERS, B, HIDDEN), jnp.float32)
    params = init_params(k_p, IN, HIDDEN)

    outs, h_n = rnn_forward(x, h0, params)
    jax.block_until_ready((outs, h_n))

    outs_ref, h_n_ref = rnn_reference(x, h0, params)
    assert outs.shape == (B, S, 1) and h_n.shape == (NUM_LAYERS, B, HIDDEN)
    assert jnp.allclose(outs, outs_ref, atol=1e-5, rtol=1e-5)
    assert jnp.allclose(h_n, h_n_ref, atol=1e-5, rtol=1e-5)

    print("KERNEL_OK")
</pallas_src>

<mosaic_0001>
module attributes {stable_mosaic.version = 11 : i64} {
  func.func @_rnn_kernel(%arg0: i32, %arg1: memref<64x4xf32, #tpu.memory_space<vmem>>, %arg2: memref<2x8x32xf32, #tpu.memory_space<vmem>>, %arg3: memref<4x32xf32, #tpu.memory_space<vmem>>, %arg4: memref<32x32xf32, #tpu.memory_space<vmem>>, %arg5: memref<1x32xf32, #tpu.memory_space<vmem>>, %arg6: memref<64x32xf32, #tpu.memory_space<vmem>>, %arg7: memref<1x32xf32, #tpu.memory_space<vmem>>, %arg8: memref<1x32xf32, #tpu.memory_space<vmem>>, %arg9: memref<1x1xf32, #tpu.memory_space<vmem>>, %arg10: memref<64x1xf32, #tpu.memory_space<vmem>>, %arg11: memref<2x8x32xf32, #tpu.memory_space<vmem>>, %arg12: memref<64x32xf32, #tpu.memory_space<vmem>>, %arg13: memref<8x32xf32, #tpu.memory_space<vmem>>, %arg14: memref<8x64xf32, #tpu.memory_space<vmem>>, %arg15: memref<64x32xf32, #tpu.memory_space<vmem>>) attributes {dimension_semantics = [#tpu.dimension_semantics<arbitrary>], iteration_bounds = array<i64: 1>, scalar_prefetch = 0 : i64, scratch_operands = 4 : i64, tpu.core_type = #tpu.core_type<tc>, window_params = [{pipeline_mode = #tpu.pipeline_mode<synchronous>, transform_indices = @transform_0, window_bounds = array<i64: 64, 4>}, {pipeline_mode = #tpu.pipeline_mode<synchronous>, transform_indices = @transform_1, window_bounds = array<i64: 2, 8, 32>}, {pipeline_mode = #tpu.pipeline_mode<synchronous>, transform_indices = @transform_2, window_bounds = array<i64: 4, 32>}, {pipeline_mode = #tpu.pipeline_mode<synchronous>, transform_indices = @transform_3, window_bounds = array<i64: 32, 32>}, {pipeline_mode = #tpu.pipeline_mode<synchronous>, transform_indices = @transform_4, window_bounds = array<i64: 1, 32>}, {pipeline_mode = #tpu.pipeline_mode<synchronous>, transform_indices = @transform_5, window_bounds = array<i64: 64, 32>}, {pipeline_mode = #tpu.pipeline_mode<synchronous>, transform_indices = @transform_6, window_bounds = array<i64: 1, 32>}, {pipeline_mode = #tpu.pipeline_mode<synchronous>, transform_indices = @transform_7, window_bounds = array<i64: 1, 32>}, {pipeline_mode = #tpu.pipeline_mode<synchronous>, transform_indices = @transform_8, window_bounds = array<i64: 1, 1>}, {pipeline_mode = #tpu.pipeline_mode<synchronous>, transform_indices = @transform_9, window_bounds = array<i64: 64, 1>}, {pipeline_mode = #tpu.pipeline_mode<synchronous>, transform_indices = @transform_10, window_bounds = array<i64: 2, 8, 32>}]} {
    %c0 = arith.constant 0 : index
    %c0_0 = arith.constant 0 : index
    %0 = vector.load %arg1[%c0, %c0_0] : memref<64x4xf32, #tpu.memory_space<vmem>>, vector<64x4xf32>
    %c0_1 = arith.constant 0 : index
    %c0_2 = arith.constant 0 : index
    %1 = vector.load %arg3[%c0_1, %c0_2] : memref<4x32xf32, #tpu.memory_space<vmem>>, vector<4x32xf32>
    %cst = arith.constant dense<0.000000e+00> : vector<64x32xf32>
    %2 = tpu.matmul %0, %1, %cst {dimension_numbers = #tpu.dot_dimension_numbers<[1], [0], [0], [1], [0, 0, 1, 1], [], []>} : vector<64x4xf32>, vector<4x32xf32>, vector<64x32xf32> -> vector<64x32xf32>
    %c0_3 = arith.constant 0 : index
    %c0_4 = arith.constant 0 : index
    %3 = vector.load %arg5[%c0_3, %c0_4] : memref<1x32xf32, #tpu.memory_space<vmem>>, vector<1x32xf32>
    %4 = vector.broadcast %3 : vector<1x32xf32> to vector<64x32xf32>
    %5 = arith.addf %2, %4 : vector<64x32xf32>
    %c0_5 = arith.constant 0 : index
    %c0_6 = arith.constant 0 : index
    %6 = vector.load %arg12[%c0_5, %c0_6] : memref<64x32xf32, #tpu.memory_space<vmem>>, vector<64x32xf32>
    tpu.vector_store %arg12[%c0_5, %c0_6], %5 {strides = array<i32>} : memref<64x32xf32, #tpu.memory_space<vmem>>, vector<64x32xf32>,
    %c0_7 = arith.constant 0 : index
    %c0_8 = arith.constant 0 : index
    %c0_9 = arith.constant 0 : index
    %7 = vector.load %arg2[%c0_7, %c0_8, %c0_9] : memref<2x8x32xf32, #tpu.memory_space<vmem>>, vector<1x8x32xf32>
    %8 = vector.shape_cast %7 : vector<1x8x32xf32> to vector<8x32xf32>
    %c0_10 = arith.constant 0 : index
    %c0_11 = arith.constant 0 : index
    %9 = vector.load %arg13[%c0_10, %c0_11] : memref<8x32xf32, #tpu.memory_space<vmem>>, vector<8x32xf32>
    tpu.vector_store %arg13[%c0_10, %c0_11], %8 {strides = array<i32>} : memref<8x32xf32, #tpu.memory_space<vmem>>, vector<8x32xf32>,
    %c1 = arith.constant 1 : index
    %c0_12 = arith.constant 0 : index
    %c0_13 = arith.constant 0 : index
    %10 = vector.load %arg2[%c1, %c0_12, %c0_13] : memref<2x8x32xf32, #tpu.memory_space<vmem>>, vector<1x8x32xf32>
    %11 = vector.shape_cast %10 : vector<1x8x32xf32> to vector<8x32xf32>
    %c0_14 = arith.constant 0 : index
    %c32 = arith.constant 32 : index
    %12 = vector.load %arg14[%c0_14, %c32] : memref<8x64xf32, #tpu.memory_space<vmem>>, vector<8x32xf32>
    tpu.vector_store %arg14[%c0_14, %c32], %11 {strides = array<i32>} : memref<8x64xf32, #tpu.memory_space<vmem>>, vector<8x32xf32>,
    %c0_i32 = arith.constant 0 : i32
    %c8_i32 = arith.constant 8 : i32
    %13 = arith.muli %c0_i32, %c8_i32 : i32
    %14 = tpu.assume_multiple %13, 8 : i32
    %15 = arith.index_cast %14 : i32 to index
    %c0_15 = arith.constant 0 : index
    %16 = vector.load %arg12[%15, %c0_15] : memref<64x32xf32, #tpu.memory_space<vmem>>, vector<8x32xf32>
    %c0_16 = arith.constant 0 : index
    %c0_17 = arith.constant 0 : index
    %17 = vector.load %arg13[%c0_16, %c0_17] : memref<8x32xf32, #tpu.memory_space<vmem>>, vector<8x32xf32>
    %c0_18 = arith.constant 0 : index
    %c0_19 = arith.constant 0 : index
    %18 = vector.load %arg4[%c0_18, %c0_19] : memref<32x32xf32, #tpu.memory_space<vmem>>, vector<32x32xf32>
    %cst_20 = arith.constant dense<0.000000e+00> : vector<8x32xf32>
    %19 = tpu.matmul %17, %18, %cst_20 {dimension_numbers = #tpu.dot_dimension_numbers<[1], [0], [0], [1], [0, 0, 1, 1], [], []>} : vector<8x32xf32>, vector<32x32xf32>, vector<8x32xf32> -> vector<8x32xf32>
    %20 = arith.addf %16, %19 : vector<8x32xf32>
    %21 = math.tanh %20 : vector<8x32xf32>
    %c0_21 = arith.constant 0 : index
    %c0_22 = arith.constant 0 : index
    %22 = vector.load %arg13[%c0_21, %c0_22] : memref<8x32xf32, #tpu.memory_space<vmem>>, vector<8x32xf32>
    tpu.vector_store %arg13[%c0_21, %c0_22], %21 {strides = array<i32>} : memref<8x32xf32, #tpu.memory_space<vmem>>, vector<8x32xf32>,
    %c0_23 = arith.constant 0 : index
    %c0_24 = arith.constant 0 : index
    %23 = vector.load %arg14[%c0_23, %c0_24] : memref<8x64xf32, #tpu.memory_space<vmem>>, vector<8x32xf32>
    tpu.vector_store %arg14[%c0_23, %c0_24], %21 {strides = array<i32>} : memref<8x64xf32, #tpu.memory_space<vmem>>, vector<8x32xf32>,
    %c0_25 = arith.constant 0 : index
    %c0_26 = arith.constant 0 : index
    %24 = vector.load %arg14[%c0_25, %c0_26] : memref<8x64xf32, #tpu.memory_space<vmem>>, vector<8x64xf32>
    %c0_27 = arith.constant 0 : index
    %c0_28 = arith.constant 0 : index
    %25 = vector.load %arg6[%c0_27, %c0_28] : memref<64x32xf32, #tpu.memory_space<vmem>>, vector<64x32xf32>
    %cst_29 = arith.constant dense<0.000000e+00> : vector<8x32xf32>
    %26 = tpu.matmul %24, %25, %cst_29 {dimension_numbers = #tpu.dot_dimension_numbers<[1], [0], [0], [1], [0, 0, 1, 1], [], []>} : vector<8x64xf32>, vector<64x32xf32>, vector<8x32xf32> -> vector<8x32xf32>
    %c0_30 = arith.constant 0 : index
    %c0_31 = arith.constant 0 : index
    %27 = vector.load %arg7[%c0_30, %c0_31] : memref<1x32xf32, #tpu.memory_space<vmem>>, vector<1x32xf32>
    %28 = vector.broadcast %27 : vector<1x32xf32> to vector<8x32xf32>
    %29 = arith.addf %26, %28 : vector<8x32xf32>
    %30 = math.tanh %29 : vector<8x32xf32>
    %c0_32 = arith.constant 0 : index
    %c32_33 = arith.constant 32 : index
    %31 = vector.load %arg14[%c0_32, %c32_33] : memref<8x64xf32, #tpu.memory_space<vmem>>, vector<8x32xf32>
    tpu.vector_store %arg14[%c0_32, %c32_33], %30 {strides = array<i32>} : memref<8x64xf32, #tpu.memory_space<vmem>>, vector<8x32xf32>,
    %32 = arith.index_cast %14 : i32 to index
    %c0_34 = arith.constant 0 : index
    %33 = vector.load %arg15[%32, %c0_34] : memref<64x32xf32, #tpu.memory_space<vmem>>, vector<8x32xf32>
    tpu.vector_store %arg15[%32, %c0_34], %30 {strides = array<i32>} : memref<64x32xf32, #tpu.memory_space<vmem>>, vector<8x32xf32>,
    %c1_i32 = arith.constant 1 : i32
    %c8_i32_35 = arith.constant 8 : i32
    %34 = arith.muli %c1_i32, %c8_i32_35 : i32
    %35 = tpu.assume_multiple %34, 8 : i32
    %36 = arith.index_cast %35 : i32 to index
    %c0_36 = arith.constant 0 : index
    %37 = vector.load %arg12[%36, %c0_36] : memref<64x32xf32, #tpu.memory_space<vmem>>, vector<8x32xf32>
    %c0_37 = arith.constant 0 : index
    %c0_38 = arith.constant 0 : index
    %38 = vector.load %arg13[%c0_37, %c0_38] : memref<8x32xf32, #tpu.memory_space<vmem>>, vector<8x32xf32>
    %c0_39 = arith.constant 0 : index
    %c0_40 = arith.constant 0 : index
    %39 = vector.load %arg4[%c0_39, %c0_40] : memref<32x32xf32, #tpu.memory_space<vmem>>, vector<32x32xf32>
    %cst_41 = arith.constant dense<0.000000e+00> : vector<8x32xf32>
    %40 = tpu.matmul %38, %39, %cst_41 {dimension_numbers = #tpu.dot_dimension_numbers<[1], [0], [0], [1], [0, 0, 1, 1], [], []>} : vector<8x32xf32>, vector<32x32xf32>, vector<8x32xf32> -> vector<8x32xf32>
    %41 = arith.addf %37, %40 : vector<8x32xf32>
    %42 = math.tanh %41 : vector<8x32xf32>
    %c0_42 = arith.constant 0 : index
    %c0_43 = arith.constant 0 : index
    %43 = vector.load %arg13[%c0_42, %c0_43] : memref<8x32xf32, #tpu.memory_space<vmem>>, vector<8x32xf32>
    tpu.vector_store %arg13[%c0_42, %c0_43], %42 {strides = array<i32>} : memref<8x32xf32, #tpu.memory_space<vmem>>, vector<8x32xf32>,
    %c0_44 = arith.constant 0 : index
    %c0_45 = arith.constant 0 : index
    %44 = vector.load %arg14[%c0_44, %c0_45] : memref<8x64xf32, #tpu.memory_space<vmem>>, vector<8x32xf32>
    tpu.vector_store %arg14[%c0_44, %c0_45], %42 {strides = array<i32>} : memref<8x64xf32, #tpu.memory_space<vmem>>, vector<8x32xf32>,
    %c0_46 = arith.constant 0 : index
    %c0_47 = arith.constant 0 : index
    %45 = vector.load %arg14[%c0_46, %c0_47] : memref<8x64xf32, #tpu.memory_space<vmem>>, vector<8x64xf32>
    %c0_48 = arith.constant 0 : index
    %c0_49 = arith.constant 0 : index
    %46 = vector.load %arg6[%c0_48, %c0_49] : memref<64x32xf32, #tpu.memory_space<vmem>>, vector<64x32xf32>
    %cst_50 = arith.constant dense<0.000000e+00> : vector<8x32xf32>
    %47 = tpu.matmul %45, %46, %cst_50 {dimension_numbers = #tpu.dot_dimension_numbers<[1], [0], [0], [1], [0, 0, 1, 1], [], []>} : vector<8x64xf32>, vector<64x32xf32>, vector<8x32xf32> -> vector<8x32xf32>
    %c0_51 = arith.constant 0 : index
    %c0_52 = arith.constant 0 : index
    %48 = vector.load %arg7[%c0_51, %c0_52] : memref<1x32xf32, #tpu.memory_space<vmem>>, vector<1x32xf32>
    %49 = vector.broadcast %48 : vector<1x32xf32> to vector<8x32xf32>
    %50 = arith.addf %47, %49 : vector<8x32xf32>
    %51 = math.tanh %50 : vector<8x32xf32>
    %c0_53 = arith.constant 0 : index
    %c32_54 = arith.constant 32 : index
    %52 = vector.load %arg14[%c0_53, %c32_54] : memref<8x64xf32, #tpu.memory_space<vmem>>, vector<8x32xf32>
    tpu.vector_store %arg14[%c0_53, %c32_54], %51 {strides = array<i32>} : memref<8x64xf32, #tpu.memory_space<vmem>>, vector<8x32xf32>,
    %53 = arith.index_cast %35 : i32 to index
    %c0_55 = arith.constant 0 : index
    %54 = vector.load %arg15[%53, %c0_55] : memref<64x32xf32, #tpu.memory_space<vmem>>, vector<8x32xf32>
    tpu.vector_store %arg15[%53, %c0_55], %51 {strides = array<i32>} : memref<64x32xf32, #tpu.memory_space<vmem>>, vector<8x32xf32>,
    %c2_i32 = arith.constant 2 : i32
    %c8_i32_56 = arith.constant 8 : i32
    %55 = arith.muli %c2_i32, %c8_i32_56 : i32
    %56 = tpu.assume_multiple %55, 8 : i32
    %57 = arith.index_cast %56 : i32 to index
    %c0_57 = arith.constant 0 : index
    %58 = vector.load %arg12[%57, %c0_57] : memref<64x32xf32, #tpu.memory_space<vmem>>, vector<8x32xf32>
    %c0_58 = arith.constant 0 : index
    %c0_59 = arith.constant 0 : index
    %59 = vector.load %arg13[%c0_58, %c0_59] : memref<8x32xf32, #tpu.memory_space<vmem>>, vector<8x32xf32>
    %c0_60 = arith.constant 0 : index
    %c0_61 = arith.constant 0 : index
    %60 = vector.load %arg4[%c0_60, %c0_61] : memref<32x32xf32, #tpu.memory_space<vmem>>, vector<32x32xf32>
    %cst_62 = arith.constant dense<0.000000e+00> : vector<8x32xf32>
    %61 = tpu.matmul %59, %60, %cst_62 {dimension_numbers = #tpu.dot_dimension_numbers<[1], [0], [0], [1], [0, 0, 1, 1], [], []>} : vector<8x32xf32>, vector<32x32xf32>, vector<8x32xf32> -> vector<8x32xf32>
    %62 = arith.addf %58, %61 : vector<8x32xf32>
    %63 = math.tanh %62 : vector<8x32xf32>
    %c0_63 = arith.constant 0 : index
    %c0_64 = arith.constant 0 : index
    %64 = vector.load %arg13[%c0_63, %c0_64] : memref<8x32xf32, #tpu.memory_space<vmem>>, vector<8x32xf32>
    tpu.vector_store %arg13[%c0_63, %c0_64], %63 {strides = array<i32>} : memref<8x32xf32, #tpu.memory_space<vmem>>, vector<8x32xf32>,
    %c0_65 = arith.constant 0 : index
    %c0_66 = arith.constant 0 : index
    %65 = vector.load %arg14[%c0_65, %c0_66] : memref<8x64xf32, #tpu.memory_space<vmem>>, vector<8x32xf32>
    tpu.vector_store %arg14[%c0_65, %c0_66], %63 {strides = array<i32>} : memref<8x64xf32, #tpu.memory_space<vmem>>, vector<8x32xf32>,
    %c0_67 = arith.constant 0 : index
    %c0_68 = arith.constant 0 : index
    %66 = vector.load %arg14[%c0_67, %c0_68] : memref<8x64xf32, #tpu.memory_space<vmem>>, vector<8x64xf32>
    %c0_69 = arith.constant 0 : index
    %c0_70 = arith.constant 0 : index
    %67 = vector.load %arg6[%c0_69, %c0_70] : memref<64x32xf32, #tpu.memory_space<vmem>>, vector<64x32xf32>
    %cst_71 = arith.constant dense<0.000000e+00> : vector<8x32xf32>
    %68 = tpu.matmul %66, %67, %cst_71 {dimension_numbers = #tpu.dot_dimension_numbers<[1], [0], [0], [1], [0, 0, 1, 1], [], []>} : vector<8x64xf32>, vector<64x32xf32>, vector<8x32xf32> -> vector<8x32xf32>
    %c0_72 = arith.constant 0 : index
    %c0_73 = arith.constant 0 : index
    %69 = vector.load %arg7[%c0_72, %c0_73] : memref<1x32xf32, #tpu.memory_space<vmem>>, vector<1x32xf32>
    %70 = vector.broadcast %69 : vector<1x32xf32> to vector<8x32xf32>
    %71 = arith.addf %68, %70 : vector<8x32xf32>
    %72 = math.tanh %71 : vector<8x32xf32>
    %c0_74 = arith.constant 0 : index
    %c32_75 = arith.constant 32 : index
    %73 = vector.load %arg14[%c0_74, %c32_75] : memref<8x64xf32, #tpu.memory_space<vmem>>, vector<8x32xf32>
    tpu.vector_store %arg14[%c0_74, %c32_75], %72 {strides = array<i32>} : memref<8x64xf32, #tpu.memory_space<vmem>>, vector<8x32xf32>,
    %74 = arith.index_cast %56 : i32 to index
    %c0_76 = arith.constant 0 : index
    %75 = vector.load %arg15[%74, %c0_76] : memref<64x32xf32, #tpu.memory_space<vmem>>, vector<8x32xf32>
    tpu.vector_store %arg15[%74, %c0_76], %72 {strides = array<i32>} : memref<64x32xf32, #tpu.memory_space<vmem>>, vector<8x32xf32>,
    %c3_i32 = arith.constant 3 : i32
    %c8_i32_77 = arith.constant 8 : i32
    %76 = arith.muli %c3_i32, %c8_i32_77 : i32
    %77 = tpu.assume_multiple %76, 8 : i32
    %78 = arith.index_cast %77 : i32 to index
    %c0_78 = arith.constant 0 : index
    %79 = vector.load %arg12[%78, %c0_78] : memref<64x32xf32, #tpu.memory_space<vmem>>, vector<8x32xf32>
    %c0_79 = arith.constant 0 : index
    %c0_80 = arith.constant 0 : index
    %80 = vector.load %arg13[%c0_79, %c0_80] : memref<8x32xf32, #tpu.memory_space<vmem>>, vector<8x32xf32>
    %c0_81 = arith.constant 0 : index
    %c0_82 = arith.constant 0 : index
    %81 = vector.load %arg4[%c0_81, %c0_82] : memref<32x32xf32, #tpu.memory_space<vmem>>, vector<32x32xf32>
    %cst_83 = arith.constant dense<0.000000e+00> : vector<8x32xf32>
    %82 = tpu.matmul %80, %81, %cst_83 {dimension_numbers = #tpu.dot_dimension_numbers<[1], [0], [0], [1], [0, 0, 1, 1], [], []>} : vector<8x32xf32>, vector<32x32xf32>, vector<8x32xf32> -> vector<8x32xf32>
    %83 = arith.addf %79, %82 : vector<8x32xf32>
    %84 = math.tanh %83 : vector<8x32xf32>
    %c0_84 = arith.constant 0 : index
    %c0_85 = arith.constant 0 : index
    %85 = vector.load %arg13[%c0_84, %c0_85] : memref<8x32xf32, #tpu.memory_space<vmem>>, vector<8x32xf32>
    tpu.vector_store %arg13[%c0_84, %c0_85], %84 {strides = array<i32>} : memref<8x32xf32, #tpu.memory_space<vmem>>, vector<8x32xf32>,
    %c0_86 = arith.constant 0 : index
    %c0_87 = arith.constant 0 : index
    %86 = vector.load %arg14[%c0_86, %c0_87] : memref<8x64xf32, #tpu.memory_space<vmem>>, vector<8x32xf32>
    tpu.vector_store %arg14[%c0_86, %c0_87], %84 {strides = array<i32>} : memref<8x64xf32, #tpu.memory_space<vmem>>, vector<8x32xf32>,
    %c0_88 = arith.constant 0 : index
    %c0_89 = arith.constant 0 : index
    %87 = vector.load %arg14[%c0_88, %c0_89] : memref<8x64xf32, #tpu.memory_space<vmem>>, vector<8x64xf32>
    %c0_90 = arith.constant 0 : index
    %c0_91 = arith.constant 0 : index
    %88 = vector.load %arg6[%c0_90, %c0_91] : memref<64x32xf32, #tpu.memory_space<vmem>>, vector<64x32xf32>
    %cst_92 = arith.constant dense<0.000000e+00> : vector<8x32xf32>
    %89 = tpu.matmul %87, %88, %cst_92 {dimension_numbers = #tpu.dot_dimension_numbers<[1], [0], [0], [1], [0, 0, 1, 1], [], []>} : vector<8x64xf32>, vector<64x32xf32>, vector<8x32xf32> -> vector<8x32xf32>
    %c0_93 = arith.constant 0 : index
    %c0_94 = arith.constant 0 : index
    %90 = vector.load %arg7[%c0_93, %c0_94] : memref<1x32xf32, #tpu.memory_space<vmem>>, vector<1x32xf32>
    %91 = vector.broadcast %90 : vector<1x32xf32> to vector<8x32xf32>
    %92 = arith.addf %89, %91 : vector<8x32xf32>
    %93 = math.tanh %92 : vector<8x32xf32>
    %c0_95 = arith.constant 0 : index
    %c32_96 = arith.constant 32 : index
    %94 = vector.load %arg14[%c0_95, %c32_96] : memref<8x64xf32, #tpu.memory_space<vmem>>, vector<8x32xf32>
    tpu.vector_store %arg14[%c0_95, %c32_96], %93 {strides = array<i32>} : memref<8x64xf32, #tpu.memory_space<vmem>>, vector<8x32xf32>,
    %95 = arith.index_cast %77 : i32 to index
    %c0_97 = arith.constant 0 : index
    %96 = vector.load %arg15[%95, %c0_97] : memref<64x32xf32, #tpu.memory_space<vmem>>, vector<8x32xf32>
    tpu.vector_store %arg15[%95, %c0_97], %93 {strides = array<i32>} : memref<64x32xf32, #tpu.memory_space<vmem>>, vector<8x32xf32>,
    %c4_i32 = arith.constant 4 : i32
    %c8_i32_98 = arith.constant 8 : i32
    %97 = arith.muli %c4_i32, %c8_i32_98 : i32
    %98 = tpu.assume_multiple %97, 8 : i32
    %99 = arith.index_cast %98 : i32 to index
    %c0_99 = arith.constant 0 : index
    %100 = vector.load %arg12[%99, %c0_99] : memref<64x32xf32, #tpu.memory_space<vmem>>, vector<8x32xf32>
    %c0_100 = arith.constant 0 : index
    %c0_101 = arith.constant 0 : index
    %101 = vector.load %arg13[%c0_100, %c0_101] : memref<8x32xf32, #tpu.memory_space<vmem>>, vector<8x32xf32>
    %c0_102 = arith.constant 0 : index
    %c0_103 = arith.constant 0 : index
    %102 = vector.load %arg4[%c0_102, %c0_103] : memref<32x32xf32, #tpu.memory_space<vmem>>, vector<32x32xf32>
    %cst_104 = arith.constant dense<0.000000e+00> : vector<8x32xf32>
    %103 = tpu.matmul %101, %102, %cst_104 {dimension_numbers = #tpu.dot_dimension_numbers<[1], [0], [0], [1], [0, 0, 1, 1], [], []>} : vector<8x32xf32>, vector<32x32xf32>, vector<8x32xf32> -> vector<8x32xf32>
    %104 = arith.addf %100, %103 : vector<8x32xf32>
    %105 = math.tanh %104 : vector<8x32xf32>
    %c0_105 = arith.constant 0 : index
    %c0_106 = arith.constant 0 : index
    %106 = vector.load %arg13[%c0_105, %c0_106] : memref<8x32xf32, #tpu.memory_space<vmem>>, vector<8x32xf32>
    tpu.vector_store %arg13[%c0_105, %c0_106], %105 {strides = array<i32>} : memref<8x32xf32, #tpu.memory_space<vmem>>, vector<8x32xf32>,
    %c0_107 = arith.constant 0 : index
    %c0_108 = arith.constant 0 : index
    %107 = vector.load %arg14[%c0_107, %c0_108] : memref<8x64xf32, #tpu.memory_space<vmem>>, vector<8x32xf32>
    tpu.vector_store %arg14[%c0_107, %c0_108], %105 {strides = array<i32>} : memref<8x64xf32, #tpu.memory_space<vmem>>, vector<8x32xf32>,
    %c0_109 = arith.constant 0 : index
    %c0_110 = arith.constant 0 : index
    %108 = vector.load %arg14[%c0_109, %c0_110] : memref<8x64xf32, #tpu.memory_space<vmem>>, vector<8x64xf32>
    %c0_111 = arith.constant 0 : index
    %c0_112 = arith.constant 0 : index
    %109 = vector.load %arg6[%c0_111, %c0_112] : memref<64x32xf32, #tpu.memory_space<vmem>>, vector<64x32xf32>
    %cst_113 = arith.constant dense<0.000000e+00> : vector<8x32xf32>
    %110 = tpu.matmul %108, %109, %cst_113 {dimension_numbers = #tpu.dot_dimension_numbers<[1], [0], [0], [1], [0, 0, 1, 1], [], []>} : vector<8x64xf32>, vector<64x32xf32>, vector<8x32xf32> -> vector<8x32xf32>
    %c0_114 = arith.constant 0 : index
    %c0_115 = arith.constant 0 : index
    %111 = vector.load %arg7[%c0_114, %c0_115] : memref<1x32xf32, #tpu.memory_space<vmem>>, vector<1x32xf32>
    %112 = vector.broadcast %111 : vector<1x32xf32> to vector<8x32xf32>
    %113 = arith.addf %110, %112 : vector<8x32xf32>
    %114 = math.tanh %113 : vector<8x32xf32>
    %c0_116 = arith.constant 0 : index
    %c32_117 = arith.constant 32 : index
    %115 = vector.load %arg14[%c0_116, %c32_117] : memref<8x64xf32, #tpu.memory_space<vmem>>, vector<8x32xf32>
    tpu.vector_store %arg14[%c0_116, %c32_117], %114 {strides = array<i32>} : memref<8x64xf32, #tpu.memory_space<vmem>>, vector<8x32xf32>,
    %116 = arith.index_cast %98 : i32 to index
    %c0_118 = arith.constant 0 : index
    %117 = vector.load %arg15[%116, %c0_118] : memref<64x32xf32, #tpu.memory_space<vmem>>, vector<8x32xf32>
    tpu.vector_store %arg15[%116, %c0_118], %114 {strides = array<i32>} : memref<64x32xf32, #tpu.memory_space<vmem>>, vector<8x32xf32>,
    %c5_i32 = arith.constant 5 : i32
    %c8_i32_119 = arith.constant 8 : i32
    %118 = arith.muli %c5_i32, %c8_i32_119 : i32
    %119 = tpu.assume_multiple %118, 8 : i32
    %120 = arith.index_cast %119 : i32 to index
    %c0_120 = arith.constant 0 : index
    %121 = vector.load %arg12[%120, %c0_120] : memref<64x32xf32, #tpu.memory_space<vmem>>, vector<8x32xf32>
    %c0_121 = arith.constant 0 : index
    %c0_122 = arith.constant 0 : index
    %122 = vector.load %arg13[%c0_121, %c0_122] : memref<8x32xf32, #tpu.memory_space<vmem>>, vector<8x32xf32>
    %c0_123 = arith.constant 0 : index
    %c0_124 = arith.constant 0 : index
    %123 = vector.load %arg4[%c0_123, %c0_124] : memref<32x32xf32, #tpu.memory_space<vmem>>, vector<32x32xf32>
    %cst_125 = arith.constant dense<0.000000e+00> : vector<8x32xf32>
    %124 = tpu.matmul %122, %123, %cst_125 {dimension_numbers = #tpu.dot_dimension_numbers<[1], [0], [0], [1], [0, 0, 1, 1], [], []>} : vector<8x32xf32>, vector<32x32xf32>, vector<8x32xf32> -> vector<8x32xf32>
    %125 = arith.addf %121, %124 : vector<8x32xf32>
    %126 = math.tanh %125 : vector<8x32xf32>
    %c0_126 = arith.constant 0 : index
    %c0_127 = arith.constant 0 : index
    %127 = vector.load %arg13[%c0_126, %c0_127] : memref<8x32xf32, #tpu.memory_space<vmem>>, vector<8x32xf32>
    tpu.vector_store %arg13[%c0_126, %c0_127], %126 {strides = array<i32>} : memref<8x32xf32, #tpu.memory_space<vmem>>, vector<8x32xf32>,
    %c0_128 = arith.constant 0 : index
    %c0_129 = arith.constant 0 : index
    %128 = vector.load %arg14[%c0_128, %c0_129] : memref<8x64xf32, #tpu.memory_space<vmem>>, vector<8x32xf32>
    tpu.vector_store %arg14[%c0_128, %c0_129], %126 {strides = array<i32>} : memref<8x64xf32, #tpu.memory_space<vmem>>, vector<8x32xf32>,
    %c0_130 = arith.constant 0 : index
    %c0_131 = arith.constant 0 : index
    %129 = vector.load %arg14[%c0_130, %c0_131] : memref<8x64xf32, #tpu.memory_space<vmem>>, vector<8x64xf32>
    %c0_132 = arith.constant 0 : index
    %c0_133 = arith.constant 0 : index
    %130 = vector.load %arg6[%c0_132, %c0_133] : memref<64x32xf32, #tpu.memory_space<vmem>>, vector<64x32xf32>
    %cst_134 = arith.constant dense<0.000000e+00> : vector<8x32xf32>
    %131 = tpu.matmul %129, %130, %cst_134 {dimension_numbers = #tpu.dot_dimension_numbers<[1], [0], [0], [1], [0, 0, 1, 1], [], []>} : vector<8x64xf32>, vector<64x32xf32>, vector<8x32xf32> -> vector<8x32xf32>
    %c0_135 = arith.constant 0 : index
    %c0_136 = arith.constant 0 : index
    %132 = vector.load %arg7[%c0_135, %c0_136] : memref<1x32xf32, #tpu.memory_space<vmem>>, vector<1x32xf32>
    %133 = vector.broadcast %132 : vector<1x32xf32> to vector<8x32xf32>
    %134 = arith.addf %131, %133 : vector<8x32xf32>
    %135 = math.tanh %134 : vector<8x32xf32>
    %c0_137 = arith.constant 0 : index
    %c32_138 = arith.constant 32 : index
    %136 = vector.load %arg14[%c0_137, %c32_138] : memref<8x64xf32, #tpu.memory_space<vmem>>, vector<8x32xf32>
    tpu.vector_store %arg14[%c0_137, %c32_138], %135 {strides = array<i32>} : memref<8x64xf32, #tpu.memory_space<vmem>>, vector<8x32xf32>,
    %137 = arith.index_cast %119 : i32 to index
    %c0_139 = arith.constant 0 : index
    %138 = vector.load %arg15[%137, %c0_139] : memref<64x32xf32, #tpu.memory_space<vmem>>, vector<8x32xf32>
    tpu.vector_store %arg15[%137, %c0_139], %135 {strides = array<i32>} : memref<64x32xf32, #tpu.memory_space<vmem>>, vector<8x32xf32>,
    %c6_i32 = arith.constant 6 : i32
    %c8_i32_140 = arith.constant 8 : i32
    %139 = arith.muli %c6_i32, %c8_i32_140 : i32
    %140 = tpu.assume_multiple %139, 8 : i32
    %141 = arith.index_cast %140 : i32 to index
    %c0_141 = arith.constant 0 : index
    %142 = vector.load %arg12[%141, %c0_141] : memref<64x32xf32, #tpu.memory_space<vmem>>, vector<8x32xf32>
    %c0_142 = arith.constant 0 : index
    %c0_143 = arith.constant 0 : index
    %143 = vector.load %arg13[%c0_142, %c0_143] : memref<8x32xf32, #tpu.memory_space<vmem>>, vector<8x32xf32>
    %c0_144 = arith.constant 0 : index
    %c0_145 = arith.constant 0 : index
    %144 = vector.load %arg4[%c0_144, %c0_145] : memref<32x32xf32, #tpu.memory_space<vmem>>, vector<32x32xf32>
    %cst_146 = arith.constant dense<0.000000e+00> : vector<8x32xf32>
    %145 = tpu.matmul %143, %144, %cst_146 {dimension_numbers = #tpu.dot_dimension_numbers<[1], [0], [0], [1], [0, 0, 1, 1], [], []>} : vector<8x32xf32>, vector<32x32xf32>, vector<8x32xf32> -> vector<8x32xf32>
    %146 = arith.addf %142, %145 : vector<8x32xf32>
    %147 = math.tanh %146 : vector<8x32xf32>
    %c0_147 = arith.constant 0 : index
    %c0_148 = arith.constant 0 : index
    %148 = vector.load %arg13[%c0_147, %c0_148] : memref<8x32xf32, #tpu.memory_space<vmem>>, vector<8x32xf32>
    tpu.vector_store %arg13[%c0_147, %c0_148], %147 {strides = array<i32>} : memref<8x32xf32, #tpu.memory_space<vmem>>, vector<8x32xf32>,
    %c0_149 = arith.constant 0 : index
    %c0_150 = arith.constant 0 : index
    %149 = vector.load %arg14[%c0_149, %c0_150] : memref<8x64xf32, #tpu.memory_space<vmem>>, vector<8x32xf32>
    tpu.vector_store %arg14[%c0_149, %c0_150], %147 {strides = array<i32>} : memref<8x64xf32, #tpu.memory_space<vmem>>, vector<8x32xf32>,
    %c0_151 = arith.constant 0 : index
    %c0_152 = arith.constant 0 : index
    %150 = vector.load %arg14[%c0_151, %c0_152] : memref<8x64xf32, #tpu.memory_space<vmem>>, vector<8x64xf32>
    %c0_153 = arith.constant 0 : index
    %c0_154 = arith.constant 0 : index
    %151 = vector.load %arg6[%c0_153, %c0_154] : memref<64x32xf32, #tpu.memory_space<vmem>>, vector<64x32xf32>
    %cst_155 = arith.constant dense<0.000000e+00> : vector<8x32xf32>
    %152 = tpu.matmul %150, %151, %cst_155 {dimension_numbers = #tpu.dot_dimension_numbers<[1], [0], [0], [1], [0, 0, 1, 1], [], []>} : vector<8x64xf32>, vector<64x32xf32>, vector<8x32xf32> -> vector<8x32xf32>
    %c0_156 = arith.constant 0 : index
    %c0_157 = arith.constant 0 : index
    %153 = vector.load %arg7[%c0_156, %c0_157] : memref<1x32xf32, #tpu.memory_space<vmem>>, vector<1x32xf32>
    %154 = vector.broadcast %153 : vector<1x32xf32> to vector<8x32xf32>
    %155 = arith.addf %152, %154 : vector<8x32xf32>
    %156 = math.tanh %155 : vector<8x32xf32>
    %c0_158 = arith.constant 0 : index
    %c32_159 = arith.constant 32 : index
    %157 = vector.load %arg14[%c0_158, %c32_159] : memref<8x64xf32, #tpu.memory_space<vmem>>, vector<8x32xf32>
    tpu.vector_store %arg14[%c0_158, %c32_159], %156 {strides = array<i32>} : memref<8x64xf32, #tpu.memory_space<vmem>>, vector<8x32xf32>,
    %158 = arith.index_cast %140 : i32 to index
    %c0_160 = arith.constant 0 : index
    %159 = vector.load %arg15[%158, %c0_160] : memref<64x32xf32, #tpu.memory_space<vmem>>, vector<8x32xf32>
    tpu.vector_store %arg15[%158, %c0_160], %156 {strides = array<i32>} : memref<64x32xf32, #tpu.memory_space<vmem>>, vector<8x32xf32>,
    %c7_i32 = arith.constant 7 : i32
    %c8_i32_161 = arith.constant 8 : i32
    %160 = arith.muli %c7_i32, %c8_i32_161 : i32
    %161 = tpu.assume_multiple %160, 8 : i32
    %162 = arith.index_cast %161 : i32 to index
    %c0_162 = arith.constant 0 : index
    %163 = vector.load %arg12[%162, %c0_162] : memref<64x32xf32, #tpu.memory_space<vmem>>, vector<8x32xf32>
    %c0_163 = arith.constant 0 : index
    %c0_164 = arith.constant 0 : index
    %164 = vector.load %arg13[%c0_163, %c0_164] : memref<8x32xf32, #tpu.memory_space<vmem>>, vector<8x32xf32>
    %c0_165 = arith.constant 0 : index
    %c0_166 = arith.constant 0 : index
    %165 = vector.load %arg4[%c0_165, %c0_166] : memref<32x32xf32, #tpu.memory_space<vmem>>, vector<32x32xf32>
    %cst_167 = arith.constant dense<0.000000e+00> : vector<8x32xf32>
    %166 = tpu.matmul %164, %165, %cst_167 {dimension_numbers = #tpu.dot_dimension_numbers<[1], [0], [0], [1], [0, 0, 1, 1], [], []>} : vector<8x32xf32>, vector<32x32xf32>, vector<8x32xf32> -> vector<8x32xf32>
    %167 = arith.addf %163, %166 : vector<8x32xf32>
    %168 = math.tanh %167 : vector<8x32xf32>
    %c0_168 = arith.constant 0 : index
    %c0_169 = arith.constant 0 : index
    %169 = vector.load %arg13[%c0_168, %c0_169] : memref<8x32xf32, #tpu.memory_space<vmem>>, vector<8x32xf32>
    tpu.vector_store %arg13[%c0_168, %c0_169], %168 {strides = array<i32>} : memref<8x32xf32, #tpu.memory_space<vmem>>, vector<8x32xf32>,
    %c0_170 = arith.constant 0 : index
    %c0_171 = arith.constant 0 : index
    %170 = vector.load %arg14[%c0_170, %c0_171] : memref<8x64xf32, #tpu.memory_space<vmem>>, vector<8x32xf32>
    tpu.vector_store %arg14[%c0_170, %c0_171], %168 {strides = array<i32>} : memref<8x64xf32, #tpu.memory_space<vmem>>, vector<8x32xf32>,
    %c0_172 = arith.constant 0 : index
    %c0_173 = arith.constant 0 : index
    %171 = vector.load %arg14[%c0_172, %c0_173] : memref<8x64xf32, #tpu.memory_space<vmem>>, vector<8x64xf32>
    %c0_174 = arith.constant 0 : index
    %c0_175 = arith.constant 0 : index
    %172 = vector.load %arg6[%c0_174, %c0_175] : memref<64x32xf32, #tpu.memory_space<vmem>>, vector<64x32xf32>
    %cst_176 = arith.constant dense<0.000000e+00> : vector<8x32xf32>
    %173 = tpu.matmul %171, %172, %cst_176 {dimension_numbers = #tpu.dot_dimension_numbers<[1], [0], [0], [1], [0, 0, 1, 1], [], []>} : vector<8x64xf32>, vector<64x32xf32>, vector<8x32xf32> -> vector<8x32xf32>
    %c0_177 = arith.constant 0 : index
    %c0_178 = arith.constant 0 : index
    %174 = vector.load %arg7[%c0_177, %c0_178] : memref<1x32xf32, #tpu.memory_space<vmem>>, vector<1x32xf32>
    %175 = vector.broadcast %174 : vector<1x32xf32> to vector<8x32xf32>
    %176 = arith.addf %173, %175 : vector<8x32xf32>
    %177 = math.tanh %176 : vector<8x32xf32>
    %c0_179 = arith.constant 0 : index
    %c32_180 = arith.constant 32 : index
    %178 = vector.load %arg14[%c0_179, %c32_180] : memref<8x64xf32, #tpu.memory_space<vmem>>, vector<8x32xf32>
    tpu.vector_store %arg14[%c0_179, %c32_180], %177 {strides = array<i32>} : memref<8x64xf32, #tpu.memory_space<vmem>>, vector<8x32xf32>,
    %179 = arith.index_cast %161 : i32 to index
    %c0_181 = arith.constant 0 : index
    %180 = vector.load %arg15[%179, %c0_181] : memref<64x32xf32, #tpu.memory_space<vmem>>, vector<8x32xf32>
    tpu.vector_store %arg15[%179, %c0_181], %177 {strides = array<i32>} : memref<64x32xf32, #tpu.memory_space<vmem>>, vector<8x32xf32>,
    %c8_i32_182 = arith.constant 8 : i32
    %c0_183 = arith.constant 0 : index
    %c0_184 = arith.constant 0 : index
    %181 = vector.load %arg15[%c0_183, %c0_184] : memref<64x32xf32, #tpu.memory_space<vmem>>, vector<64x32xf32>
    %c0_185 = arith.constant 0 : index
    %c0_186 = arith.constant 0 : index
    %182 = vector.load %arg8[%c0_185, %c0_186] : memref<1x32xf32, #tpu.memory_space<vmem>>, vector<1x32xf32>
    %183 = vector.broadcast %182 : vector<1x32xf32> to vector<64x32xf32>
    %184 = arith.mulf %181, %183 : vector<64x32xf32>
    %cst_187 = arith.constant dense<0.000000e+00> : vector<64xf32>
    %185 = vector.multi_reduction <add>, %184, %cst_187 [1] : vector<64x32xf32> to vector<64xf32>
    %186 = vector.shape_cast %185 : vector<64xf32> to vector<64x1xf32>
    %c0_188 = arith.constant 0 : index
    %c0_189 = arith.constant 0 : index
    %187 = vector.load %arg9[%c0_188, %c0_189] : memref<1x1xf32, #tpu.memory_space<vmem>>, vector<1x1xf32>
    %188 = vector.broadcast %187 : vector<1x1xf32> to vector<64x1xf32>
    %189 = arith.addf %186, %188 : vector<64x1xf32>
    %c0_190 = arith.constant 0 : index
    %c0_191 = arith.constant 0 : index
    %190 = vector.load %arg10[%c0_190, %c0_191] : memref<64x1xf32, #tpu.memory_space<vmem>>, vector<64x1xf32>
    tpu.vector_store %arg10[%c0_190, %c0_191], %189 {strides = array<i32>} : memref<64x1xf32, #tpu.memory_space<vmem>>, vector<64x1xf32>,
    %c0_192 = arith.constant 0 : index
    %c0_193 = arith.constant 0 : index
    %191 = vector.load %arg13[%c0_192, %c0_193] : memref<8x32xf32, #tpu.memory_space<vmem>>, vector<8x32xf32>
    %c0_194 = arith.constant 0 : index
    %c0_195 = arith.constant 0 : index
    %c0_196 = arith.constant 0 : index
    %192 = vector.load %arg11[%c0_194, %c0_195, %c0_196] : memref<2x8x32xf32, #tpu.memory_space<vmem>>, vector<1x8x32xf32>
    %193 = vector.shape_cast %192 : vector<1x8x32xf32> to vector<8x32xf32>
    %194 = vector.shape_cast %191 : vector<8x32xf32> to vector<1x8x32xf32>
    tpu.vector_store %arg11[%c0_194, %c0_195, %c0_196], %194 {strides = array<i32>} : memref<2x8x32xf32, #tpu.memory_space<vmem>>, vector<1x8x32xf32>,
    %c0_197 = arith.constant 0 : index
    %c32_198 = arith.constant 32 : index
    %195 = vector.load %arg14[%c0_197, %c32_198] : memref<8x64xf32, #tpu.memory_space<vmem>>, vector<8x32xf32>
    %c1_199 = arith.constant 1 : index
    %c0_200 = arith.constant 0 : index
    %c0_201 = arith.constant 0 : index
    %196 = vector.load %arg11[%c1_199, %c0_200, %c0_201] : memref<2x8x32xf32, #tpu.memory_space<vmem>>, vector<1x8x32xf32>
    %197 = vector.shape_cast %196 : vector<1x8x32xf32> to vector<8x32xf32>
    %198 = vector.shape_cast %195 : vector<8x32xf32> to vector<1x8x32xf32>
    tpu.vector_store %arg11[%c1_199, %c0_200, %c0_201], %198 {strides = array<i32>} : memref<2x8x32xf32, #tpu.memory_space<vmem>>, vector<1x8x32xf32>,
    return
  }
  func.func @transform_0(%arg0: i32) -> (i32, i32) {
    %c0_i32 = arith.constant 0 : i32
    %c0_i32_0 = arith.constant 0 : i32
    %c0_i32_1 = arith.constant 0 : i32
    return %c0_i32, %c0_i32_0 : i32, i32
  }
  func.func @transform_1(%arg0: i32) -> (i32, i32, i32) {
    %c0_i32 = arith.constant 0 : i32
    %c0_i32_0 = arith.constant 0 : i32
    %c0_i32_1 = arith.constant 0 : i32
    %c0_i32_2 = arith.constant 0 : i32
    return %c0_i32, %c0_i32_0, %c0_i32_1 : i32, i32, i32
  }
  func.func @transform_2(%arg0: i32) -> (i32, i32) {
    %c0_i32 = arith.constant 0 : i32
    %c0_i32_0 = arith.constant 0 : i32
    %c0_i32_1 = arith.constant 0 : i32
    return %c0_i32, %c0_i32_0 : i32, i32
  }
  func.func @transform_3(%arg0: i32) -> (i32, i32) {
    %c0_i32 = arith.constant 0 : i32
    %c0_i32_0 = arith.constant 0 : i32
    %c0_i32_1 = arith.constant 0 : i32
    return %c0_i32, %c0_i32_0 : i32, i32
  }
  func.func @transform_4(%arg0: i32) -> (i32, i32) {
    %c0_i32 = arith.constant 0 : i32
    %c0_i32_0 = arith.constant 0 : i32
    %c0_i32_1 = arith.constant 0 : i32
    return %c0_i32, %c0_i32_0 : i32, i32
  }
  func.func @transform_5(%arg0: i32) -> (i32, i32) {
    %c0_i32 = arith.constant 0 : i32
    %c0_i32_0 = arith.constant 0 : i32
    %c0_i32_1 = arith.constant 0 : i32
    return %c0_i32, %c0_i32_0 : i32, i32
  }
  func.func @transform_6(%arg0: i32) -> (i32, i32) {
    %c0_i32 = arith.constant 0 : i32
    %c0_i32_0 = arith.constant 0 : i32
    %c0_i32_1 = arith.constant 0 : i32
    return %c0_i32, %c0_i32_0 : i32, i32
  }
  func.func @transform_7(%arg0: i32) -> (i32, i32) {
    %c0_i32 = arith.constant 0 : i32
    %c0_i32_0 = arith.constant 0 : i32
    %c0_i32_1 = arith.constant 0 : i32
    return %c0_i32, %c0_i32_0 : i32, i32
  }
  func.func @transform_8(%arg0: i32) -> (i32, i32) {
    %c0_i32 = arith.constant 0 : i32
    %c0_i32_0 = arith.constant 0 : i32
    %c0_i32_1 = arith.constant 0 : i32
    return %c0_i32, %c0_i32_0 : i32, i32
  }
  func.func @transform_9(%arg0: i32) -> (i32, i32) {
    %c0_i32 = arith.constant 0 : i32
    %c0_i32_0 = arith.constant 0 : i32
    %c0_i32_1 = arith.constant 0 : i32
    return %c0_i32, %c0_i32_0 : i32, i32
  }
  func.func @transform_10(%arg0: i32) -> (i32, i32, i32) {
    %c0_i32 = arith.constant 0 : i32
    %c0_i32_0 = arith.constant 0 : i32
    %c0_i32_1 = arith.constant 0 : i32
    %c0_i32_2 = arith.constant 0 : i32
    return %c0_i32, %c0_i32_0, %c0_i32_1 : i32, i32, i32
  }
}

</mosaic_0001>

<llo_original>
// kernel: rnn_forward.1
$region0: #{rnn_forward.1}
  #allocation0 [shape = 'u32[]', space=smem, size = 0x4, offset = 0x4, fixed_abs, tag = 'smem constant byte address 0x4 - core index']
  #allocation1 [shape = 'u32[144,128]{1,0:T(1,128)}', space=vmem, size = 0x12000, scoped, tag = 'internal scratch']
  #allocation2 [shape = 'f32[64,32]{1,0:T(8,128)}', space=vmem, size = 0x8000, scoped, tag = 'scratch operand']
  #allocation3 [shape = 'f32[8,32]{1,0:T(8,128)}', space=vmem, size = 0x1000, scoped, tag = 'scratch operand']
  #allocation4 [shape = 'f32[8,64]{1,0:T(8,128)}', space=vmem, size = 0x1000, scoped, tag = 'scratch operand']
  #allocation5 [shape = 'f32[64,32]{1,0:T(8,128)}', space=vmem, size = 0x8000, scoped, tag = 'scratch operand']
  #allocation6 [shape = 'f32[1,1]{1,0:T(1,128)S(1)}', space=vmem, size = 0x200, scoped, tag = 'scoped memory for rnn_forward.1']
  %s0 = inlined_call_operand.vmem [shape: f32[64,4], index: 0, kind: input, shape index: {}]
  %s1 = inlined_call_operand.vmem [shape: f32[2,8,32], index: 1, kind: input, shape index: {}]
  %s2 = inlined_call_operand.vmem [shape: f32[4,32], index: 2, kind: input, shape index: {}]
  %s3 = inlined_call_operand.vmem [shape: f32[32,32], index: 3, kind: input, shape index: {}]
  %s4 = inlined_call_operand.vmem [shape: f32[1,32], index: 4, kind: input, shape index: {}]
  %s5 = inlined_call_operand.vmem [shape: f32[64,32], index: 5, kind: input, shape index: {}]
  %s6 = inlined_call_operand.vmem [shape: f32[1,32], index: 6, kind: input, shape index: {}]
  %s7 = inlined_call_operand.vmem [shape: f32[1,32], index: 7, kind: input, shape index: {}]
  %s8 = inlined_call_operand.<no memory space> [shape: f32[1,1], index: 8, kind: input, shape index: {}]
  %s9 = inlined_call_operand.vmem [shape: f32[64,1], index: 9, kind: output, shape index: {0}]
  %s10 = inlined_call_operand.vmem [shape: f32[2,8,32], index: 10, kind: output, shape index: {1}]
  %11 = xla_tuple %s9, %s10
  %s12 = sld [smem:[#allocation0]]
  $region54: #{rnn_forward.1} parent=0
    _
  %s14 = ssub.s32 1, %s12
  %s15 = scalar_select 0, %s14, %s12
  %v16 = vstv %s8
  %17 = vst [vmem:[#allocation6] sm:$0x1] %v16
  // Predicated region
  $region2: #{rnn_forward.1} parent=0 // pred_check
    _
  $region3: #{rnn_forward.1} parent=0 // pred_check_branch
    %19 = sbr.rel (0) target = $region5
  $region4: #{rnn_forward.1} parent=0 // pred_region
    _
  $region5: #{rnn_forward.1} parent=0 // pred_fallthru
    _
  // Predicated region
  $region6: #{rnn_forward.1} parent=0 // pred_check
    _
  $region7: #{rnn_forward.1} parent=0 // pred_check_branch
    %21 = sbr.rel (0) target = $region9
  $region8: #{rnn_forward.1} parent=0 // pred_region
    _
  $region9: #{rnn_forward.1} parent=0 // pred_fallthru
    _
  // Predicated region
  $region10: #{rnn_forward.1} parent=0 // pred_check
    _
  $region11: #{rnn_forward.1} parent=0 // pred_check_branch
    %23 = sbr.rel (0) target = $region13
  $region12: #{rnn_forward.1} parent=0 // pred_region
    _
  $region13: #{rnn_forward.1} parent=0 // pred_fallthru
    _
  // Predicated region
  $region14: #{rnn_forward.1} parent=0 // pred_check
    _
  $region15: #{rnn_forward.1} parent=0 // pred_check_branch
    %25 = sbr.rel (0) target = $region17
  $region16: #{rnn_forward.1} parent=0 // pred_region
    _
  $region17: #{rnn_forward.1} parent=0 // pred_fallthru
    _
  // Predicated region
  $region18: #{rnn_forward.1} parent=0 // pred_check
    _
  $region19: #{rnn_forward.1} parent=0 // pred_check_branch
    %27 = sbr.rel (0) target = $region21
  $region20: #{rnn_forward.1} parent=0 // pred_region
    _
  $region21: #{rnn_forward.1} parent=0 // pred_fallthru
    _
  // Predicated region
  $region22: #{rnn_forward.1} parent=0 // pred_check
    _
  $region23: #{rnn_forward.1} parent=0 // pred_check_branch
    %29 = sbr.rel (0) target = $region25
  $region24: #{rnn_forward.1} parent=0 // pred_region
    _
  $region25: #{rnn_forward.1} parent=0 // pred_fallthru
    _
  // Predicated region
  $region26: #{rnn_forward.1} parent=0 // pred_check
    _
  $region27: #{rnn_forward.1} parent=0 // pred_check_branch
    %31 = sbr.rel (0) target = $region29
  $region28: #{rnn_forward.1} parent=0 // pred_region
    _
  $region29: #{rnn_forward.1} parent=0 // pred_fallthru
    _
  // Predicated region
  $region30: #{rnn_forward.1} parent=0 // pred_check
    _
  $region31: #{rnn_forward.1} parent=0 // pred_check_branch
    %33 = sbr.rel (0) target = $region33
  $region32: #{rnn_forward.1} parent=0 // pred_region
    _
  $region33: #{rnn_forward.1} parent=0 // pred_fallthru
    _
  // Predicated region
  $region34: #{rnn_forward.1} parent=0 // pred_check
    _
  $region35: #{rnn_forward.1} parent=0 // pred_check_branch
    %35 = sbr.rel (0) target = $region37
  $region36: #{rnn_forward.1} parent=0 // pred_region
    _
  $region37: #{rnn_forward.1} parent=0 // pred_fallthru
    _
  %v36 = vld [vmem:[%s0] sm:$0xff]
  %v37 = vld [vmem:[%s0 + $0x8] sm:$0xff]
  %v38 = vld [vmem:[%s0 + $0x10] sm:$0xff]
  %v39 = vld [vmem:[%s0 + $0x18] sm:$0xff]
  %v40 = vld [vmem:[%s0 + $0x20] sm:$0xff]
  %v41 = vld [vmem:[%s0 + $0x28] sm:$0xff]
  %v42 = vld [vmem:[%s0 + $0x30] sm:$0xff]
  %v43 = vld [vmem:[%s0 + $0x38] sm:$0xff]
  %v44 = vld [vmem:[%s2] sm:$0xf]
  %v45 = vld [vmem:[%s4] sm:$0x1]
  %v47 = vlaneseq
  %v48 = vshrl.u32 %v47, 7
  %v49 = vsub.s32 0, %v48
  %v50 = vrot.slane %v45, %v49
  %vm52 = vcmask 31744
  %v54 = vsel %vm52, %v36, 0
  %v57 = vsel %vm52, %v37, 0
  %v60 = vsel %vm52, %v38, 0
  %v63 = vsel %vm52, %v39, 0
  %v66 = vsel %vm52, %v40, 0
  %v69 = vsel %vm52, %v41, 0
  %v72 = vsel %vm52, %v42, 0
  %v75 = vsel %vm52, %v43, 0
  %vm77 = vcmask 1043456
  %v79 = vsel %vm77, %v44, 0
  %81 = vmatprep.subr.mxu0 0.0
  %82 = vmatpush1.msra.mxu0 %v79
  %83 = vmatprep.subr.mxu0 0.0
  %84 = vmatpush1.msra.mxu0 0.0
  %85 = vmatprep.subr.mxu0 0.0
  %86 = vmatpush1.msra.mxu0 0.0
  %87 = vmatprep.subr.mxu0 0.0
  %88 = vmatpush1.msra.mxu0 0.0
  %89 = vmatprep.subr.mxu0 0.0
  %90 = vmatpush1.msra.mxu0 0.0
  %91 = vmatprep.subr.mxu0 0.0
  %92 = vmatpush1.msra.mxu0 0.0
  %93 = vmatprep.subr.mxu0 0.0
  %94 = vmatpush1.msra.mxu0 0.0
  %95 = vmatprep.subr.mxu0 0.0
  %96 = vmatpush1.msra.mxu0 0.0
  %97 = vmatprep.subr.mxu0 0.0
  %98 = vmatpush1.msra.mxu0 0.0
  %99 = vmatprep.subr.mxu0 0.0
  %100 = vmatpush1.msra.mxu0 0.0
  %101 = vmatprep.subr.mxu0 0.0
  %102 = vmatpush1.msra.mxu0 0.0
  %103 = vmatprep.subr.mxu0 0.0
  %104 = vmatpush1.msra.mxu0 0.0
  %105 = vmatprep.subr.mxu0 0.0
  %106 = vmatpush1.msra.mxu0 0.0
  %107 = vmatprep.subr.mxu0 0.0
  %108 = vmatpush1.msra.mxu0 0.0
  %109 = vmatprep.subr.mxu0 0.0
  %110 = vmatpush1.msra.mxu0 0.0
  %111 = vmatprep.subr.mxu0 0.0
  %112 = vmatpush1.msra.mxu0 0.0
  %113 = vmatprep.subr.mxu0 0.0
  %114 = vmatpush1.msra.mxu0 0.0
  %115 = vmatprep.subr.mxu0 0.0
  %116 = vmatpush1.msra.mxu0 0.0
  %117 = vmatprep.subr.mxu0 0.0
  %118 = vmatpush1.msra.mxu0 0.0
  %119 = vmatprep.subr.mxu0 0.0
  %120 = vmatpush1.msra.mxu0 0.0
  %121 = vmatprep.subr.mxu0 0.0
  %122 = vmatpush1.msra.mxu0 0.0
  %123 = vmatprep.subr.mxu0 0.0
  %124 = vmatpush1.msra.mxu0 0.0
  %125 = vmatprep.subr.mxu0 0.0
  %126 = vmatpush1.msra.mxu0 0.0
  %127 = vmatprep.subr.mxu0 0.0
  %128 = vmatpush1.msra.mxu0 0.0
  %129 = vmatprep.subr.mxu0 0.0
  %130 = vmatpush1.msra.mxu0 0.0
  %131 = vmatprep.subr.mxu0 0.0
  %132 = vmatpush1.msra.mxu0 0.0
  %133 = vmatprep.subr.mxu0 0.0
  %134 = vmatpush1.msra.mxu0 0.0
  %135 = vmatprep.subr.mxu0 0.0
  %136 = vmatpush1.msra.mxu0 0.0
  %137 = vmatprep.subr.mxu0 0.0
  %138 = vmatpush1.msra.mxu0 0.0
  %139 = vmatprep.subr.mxu0 0.0
  %140 = vmatpush1.msra.mxu0 0.0
  %141 = vmatprep.subr.mxu0 0.0
  %142 = vmatpush1.msra.mxu0 0.0
  %143 = vmatprep.subr.mxu0 0.0
  %144 = vmatpush1.msra.mxu0 0.0
  %145 = vmatprep.mubr.f32.mxu0 0.0
  %146 = vmatmul.mubr.f32.gmra.mrb[0].mxu0 %v54
  %v147 = vpop.f32.mrb[0].mxu0
  %v148 = vadd.f32 %v50, %v147
  %v149 = vpop.f32.mrb[0].mxu0
  %150 = vmatprep.mubr.f32.mxu0 0.0
  %151 = vmatmul.mubr.f32.gmra.mrb[0].mxu0 %v57
  %v152 = vpop.f32.mrb[0].mxu0
  %v153 = vadd.f32 %v50, %v152
  %v154 = vpop.f32.mrb[0].mxu0
  %155 = vmatprep.mubr.f32.mxu0 0.0
  %156 = vmatmul.mubr.f32.gmra.mrb[0].mxu0 %v60
  %v157 = vpop.f32.mrb[0].mxu0
  %v158 = vadd.f32 %v50, %v157
  %v159 = vpop.f32.mrb[0].mxu0
  %160 = vmatprep.mubr.f32.mxu0 0.0
  %161 = vmatmul.mubr.f32.gmra.mrb[0].mxu0 %v63
  %v162 = vpop.f32.mrb[0].mxu0
  %v163 = vadd.f32 %v50, %v162
  %v164 = vpop.f32.mrb[0].mxu0
  %165 = vmatprep.mubr.f32.mxu0 0.0
  %166 = vmatmul.mubr.f32.gmra.mrb[0].mxu0 %v66
  %v167 = vpop.f32.mrb[0].mxu0
  %v168 = vadd.f32 %v50, %v167
  %v169 = vpop.f32.mrb[0].mxu0
  %170 = vmatprep.mubr.f32.mxu0 0.0
  %171 = vmatmul.mubr.f32.gmra.mrb[0].mxu0 %v69
  %v172 = vpop.f32.mrb[0].mxu0
  %v173 = vadd.f32 %v50, %v172
  %v174 = vpop.f32.mrb[0].mxu0
  %175 = vmatprep.mubr.f32.mxu0 0.0
  %176 = vmatmul.mubr.f32.gmra.mrb[0].mxu0 %v72
  %v177 = vpop.f32.mrb[0].mxu0
  %v178 = vadd.f32 %v50, %v177
  %v179 = vpop.f32.mrb[0].mxu0
  %180 = vmatprep.mubr.f32.mxu0 0.0
  %181 = vmatmul.mubr.f32.gmra.mrb[0].mxu0 %v75
  %v182 = vpop.f32.mrb[0].mxu0
  %v183 = vadd.f32 %v50, %v182
  %v184 = vpop.f32.mrb[0].mxu0
  %185 = vdwg.mxu0
  %vm186 = vcmask 261120
  %187 = vst.msk [vmem:[#allocation2] sm:$0xff] %vm186, %v148
  %188 = vst.msk [vmem:[#allocation2 + $0x8] sm:$0xff] %vm186, %v153
  %189 = vst.msk [vmem:[#allocation2 + $0x10] sm:$0xff] %vm186, %v158
  %190 = vst.msk [vmem:[#allocation2 + $0x18] sm:$0xff] %vm186, %v163
  %191 = vst.msk [vmem:[#allocation2 + $0x20] sm:$0xff] %vm186, %v168
  %192 = vst.msk [vmem:[#allocation2 + $0x28] sm:$0xff] %vm186, %v173
  %193 = vst.msk [vmem:[#allocation2 + $0x30] sm:$0xff] %vm186, %v178
  %194 = vst.msk [vmem:[#allocation2 + $0x38] sm:$0xff] %vm186, %v183
  %v195 = vld [vmem:[%s1] sm:$0xff]
  %196 = vst.msk [vmem:[#allocation3] sm:$0xff] %vm186, %v195
  %s197 = scalar_lea.vmem %s1, 8
  %v198 = vld [vmem:[%s197] sm:$0xff]
  %200 = vrot.lane.b32.xlu0 %v198, 32
  %v201 = vpop.permute.xlu0 %200
  %vm203 = vcmask 523520
  %204 = vst.msk [vmem:[#allocation4] sm:$0xff] %vm203, %v201
  %v205 = vld [vmem:[#allocation2] sm:$0xff]
  %v206 = vld [vmem:[#allocation3] sm:$0xff]
  %v207 = vld [vmem:[%s3] sm:$0xff]
  %v208 = vld [vmem:[%s3 + $0x8] sm:$0xff]
  %v209 = vld [vmem:[%s3 + $0x10] sm:$0xff]
  %v210 = vld [vmem:[%s3 + $0x18] sm:$0xff]
  %v212 = vsel %vm186, %v206, 0
  %214 = vmatprep.subr.mxu0 0.0
  %215 = vmatpush1.msra.mxu0 %v207
  %216 = vmatprep.subr.mxu0 0.0
  %217 = vmatpush1.msra.mxu0 %v208
  %218 = vmatprep.subr.mxu0 0.0
  %219 = vmatpush1.msra.mxu0 %v209
  %220 = vmatprep.subr.mxu0 0.0
  %221 = vmatpush1.msra.mxu0 %v210
  %222 = vmatprep.subr.mxu0 0.0
  %223 = vmatpush1.msra.mxu0 0.0
  %224 = vmatprep.subr.mxu0 0.0
  %225 = vmatpush1.msra.mxu0 0.0
  %226 = vmatprep.subr.mxu0 0.0
  %227 = vmatpush1.msra.mxu0 0.0
  %228 = vmatprep.subr.mxu0 0.0
  %229 = vmatpush1.msra.mxu0 0.0
  %230 = vmatprep.subr.mxu0 0.0
  %231 = vmatpush1.msra.mxu0 0.0
  %232 = vmatprep.subr.mxu0 0.0
  %233 = vmatpush1.msra.mxu0 0.0
  %234 = vmatprep.subr.mxu0 0.0
  %235 = vmatpush1.msra.mxu0 0.0
  %236 = vmatprep.subr.mxu0 0.0
  %237 = vmatpush1.msra.mxu0 0.0
  %238 = vmatprep.subr.mxu0 0.0
  %239 = vmatpush1.msra.mxu0 0.0
  %240 = vmatprep.subr.mxu0 0.0
  %241 = vmatpush1.msra.mxu0 0.0
  %242 = vmatprep.subr.mxu0 0.0
  %243 = vmatpush1.msra.mxu0 0.0
  %244 = vmatprep.subr.mxu0 0.0
  %245 = vmatpush1.msra.mxu0 0.0
  %246 = vmatprep.subr.mxu0 0.0
  %247 = vmatpush1.msra.mxu0 0.0
  %248 = vmatprep.subr.mxu0 0.0
  %249 = vmatpush1.msra.mxu0 0.0
  %250 = vmatprep.subr.mxu0 0.0
  %251 = vmatpush1.msra.mxu0 0.0
  %252 = vmatprep.subr.mxu0 0.0
  %253 = vmatpush1.msra.mxu0 0.0
  %254 = vmatprep.subr.mxu0 0.0
  %255 = vmatpush1.msra.mxu0 0.0
  %256 = vmatprep.subr.mxu0 0.0
  %257 = vmatpush1.msra.mxu0 0.0
  %258 = vmatprep.subr.mxu0 0.0
  %259 = vmatpush1.msra.mxu0 0.0
  %260 = vmatprep.subr.mxu0 0.0
  %261 = vmatpush1.msra.mxu0 0.0
  %262 = vmatprep.subr.mxu0 0.0
  %263 = vmatpush1.msra.mxu0 0.0
  %264 = vmatprep.subr.mxu0 0.0
  %265 = vmatpush1.msra.mxu0 0.0
  %266 = vmatprep.subr.mxu0 0.0
  %267 = vmatpush1.msra.mxu0 0.0
  %268 = vmatprep.subr.mxu0 0.0
  %269 = vmatpush1.msra.mxu0 0.0
  %270 = vmatprep.subr.mxu0 0.0
  %271 = vmatpush1.msra.mxu0 0.0
  %272 = vmatprep.subr.mxu0 0.0
  %273 = vmatpush1.msra.mxu0 0.0
  %274 = vmatprep.subr.mxu0 0.0
  %275 = vmatpush1.msra.mxu0 0.0
  %276 = vmatprep.subr.mxu0 0.0
  %277 = vmatpush1.msra.mxu0 0.0
  %278 = vmatprep.mubr.f32.mxu0 0.0
  %279 = vmatmul.mubr.f32.gmra.mrb[0].mxu0 %v212
  %v280 = vpop.f32.mrb[0].mxu0
  %v281 = vadd.f32 0.0, %v280
  %v282 = vpop.f32.mrb[0].mxu0
  %283 = vdwg.mxu0
  %v284 = vadd.f32 %v205, %v281
  %v285 = vtanh.pop %v284
  %286 = vst.msk [vmem:[#allocation3] sm:$0xff] %vm186, %v285
  %287 = vst.msk [vmem:[#allocation4] sm:$0xff] %vm186, %v285
  %v288 = vld [vmem:[#allocation4] sm:$0xff]
  %v289 = vld [vmem:[%s5] sm:$0xff]
  %v290 = vld [vmem:[%s5 + $0x8] sm:$0xff]
  %v291 = vld [vmem:[%s5 + $0x10] sm:$0xff]
  %v292 = vld [vmem:[%s5 + $0x18] sm:$0xff]
  %v293 = vld [vmem:[%s5 + $0x20] sm:$0xff]
  %v294 = vld [vmem:[%s5 + $0x28] sm:$0xff]
  %v295 = vld [vmem:[%s5 + $0x30] sm:$0xff]
  %v296 = vld [vmem:[%s5 + $0x38] sm:$0xff]
  %v297 = vld [vmem:[%s6] sm:$0x1]
  %v299 = vlaneseq
  %v300 = vshrl.u32 %v299, 7
  %v301 = vsub.s32 0, %v300
  %v302 = vrot.slane %v297, %v301
  %vm304 = vcmask 523264
  %v306 = vsel %vm304, %v288, 0
  %308 = vmatprep.subr.mxu0 0.0
  %309 = vmatpush1.msra.mxu0 %v289
  %310 = vmatprep.subr.mxu0 0.0
  %311 = vmatpush1.msra.mxu0 %v290
  %312 = vmatprep.subr.mxu0 0.0
  %313 = vmatpush1.msra.mxu0 %v291
  %314 = vmatprep.subr.mxu0 0.0
  %315 = vmatpush1.msra.mxu0 %v292
  %316 = vmatprep.subr.mxu0 0.0
  %317 = vmatpush1.msra.mxu0 %v293
  %318 = vmatprep.subr.mxu0 0.0
  %319 = vmatpush1.msra.mxu0 %v294
  %320 = vmatprep.subr.mxu0 0.0
  %321 = vmatpush1.msra.mxu0 %v295
  %322 = vmatprep.subr.mxu0 0.0
  %323 = vmatpush1.msra.mxu0 %v296
  %324 = vmatprep.subr.mxu0 0.0
  %325 = vmatpush1.msra.mxu0 0.0
  %326 = vmatprep.subr.mxu0 0.0
  %327 = vmatpush1.msra.mxu0 0.0
  %328 = vmatprep.subr.mxu0 0.0
  %329 = vmatpush1.msra.mxu0 0.0
  %330 = vmatprep.subr.mxu0 0.0
  %331 = vmatpush1.msra.mxu0 0.0
  %332 = vmatprep.subr.mxu0 0.0
  %333 = vmatpush1.msra.mxu0 0.0
  %334 = vmatprep.subr.mxu0 0.0
  %335 = vmatpush1.msra.mxu0 0.0
  %336 = vmatprep.subr.mxu0 0.0
  %337 = vmatpush1.msra.mxu0 0.0
  %338 = vmatprep.subr.mxu0 0.0
  %339 = vmatpush1.msra.mxu0 0.0
  %340 = vmatprep.subr.mxu0 0.0
  %341 = vmatpush1.msra.mxu0 0.0
  %342 = vmatprep.subr.mxu0 0.0
  %343 = vmatpush1.msra.mxu0 0.0
  %344 = vmatprep.subr.mxu0 0.0
  %345 = vmatpush1.msra.mxu0 0.0
  %346 = vmatprep.subr.mxu0 0.0
  %347 = vmatpush1.msra.mxu0 0.0
  %348 = vmatprep.subr.mxu0 0.0
  %349 = vmatpush1.msra.mxu0 0.0
  %350 = vmatprep.subr.mxu0 0.0
  %351 = vmatpush1.msra.mxu0 0.0
  %352 = vmatprep.subr.mxu0 0.0
  %353 = vmatpush1.msra.mxu0 0.0
  %354 = vmatprep.subr.mxu0 0.0
  %355 = vmatpush1.msra.mxu0 0.0
  %356 = vmatprep.subr.mxu0 0.0
  %357 = vmatpush1.msra.mxu0 0.0
  %358 = vmatprep.subr.mxu0 0.0
  %359 = vmatpush1.msra.mxu0 0.0
  %360 = vmatprep.subr.mxu0 0.0
  %361 = vmatpush1.msra.mxu0 0.0
  %362 = vmatprep.subr.mxu0 0.0
  %363 = vmatpush1.msra.mxu0 0.0
  %364 = vmatprep.subr.mxu0 0.0
  %365 = vmatpush1.msra.mxu0 0.0
  %366 = vmatprep.subr.mxu0 0.0
  %367 = vmatpush1.msra.mxu0 0.0
  %368 = vmatprep.subr.mxu0 0.0
  %369 = vmatpush1.msra.mxu0 0.0
  %370 = vmatprep.subr.mxu0 0.0
  %371 = vmatpush1.msra.mxu0 0.0
  %372 = vmatprep.mubr.f32.mxu0 0.0
  %373 = vmatmul.mubr.f32.gmra.mrb[0].mxu0 %v306
  %v374 = vpop.f32.mrb[0].mxu0
  %v375 = vadd.f32 %v302, %v374
  %v376 = vpop.f32.mrb[0].mxu0
  %377 = vdwg.mxu0
  %v378 = vtanh.pop %v375
  %380 = vrot.lane.b32.xlu0 %v378, 32
  %v381 = vpop.permute.xlu0 %380
  %383 = vst.msk [vmem:[#allocation4] sm:$0xff] %vm203, %v381
  %384 = vst.msk [vmem:[#allocation5] sm:$0xff] %vm186, %v378
  %s385 = scalar_lea.vmem [#allocation2], 8
  %v386 = vld [vmem:[%s385] sm:$0xff]
  %v387 = vld [vmem:[#allocation3] sm:$0xff]
  %v388 = vld [vmem:[%s3] sm:$0xff]
  %v389 = vld [vmem:[%s3 + $0x8] sm:$0xff]
  %v390 = vld [vmem:[%s3 + $0x10] sm:$0xff]
  %v391 = vld [vmem:[%s3 + $0x18] sm:$0xff]
  %v393 = vsel %vm186, %v387, 0
  %395 = vmatprep.subr.mxu0 0.0
  %396 = vmatpush1.msra.mxu0 %v388
  %397 = vmatprep.subr.mxu0 0.0
  %398 = vmatpush1.msra.mxu0 %v389
  %399 = vmatprep.subr.mxu0 0.0
  %400 = vmatpush1.msra.mxu0 %v390
  %401 = vmatprep.subr.mxu0 0.0
  %402 = vmatpush1.msra.mxu0 %v391
  %403 = vmatprep.subr.mxu0 0.0
  %404 = vmatpush1.msra.mxu0 0.0
  %405 = vmatprep.subr.mxu0 0.0
  %406 = vmatpush1.msra.mxu0 0.0
  %407 = vmatprep.subr.mxu0 0.0
  %408 = vmatpush1.msra.mxu0 0.0
  %409 = vmatprep.subr.mxu0 0.0
  %410 = vmatpush1.msra.mxu0 0.0
  %411 = vmatprep.subr.mxu0 0.0
  %412 = vmatpush1.msra.mxu0 0.0
  %413 = vmatprep.subr.mxu0 0.0
  %414 = vmatpush1.msra.mxu0 0.0
  %415 = vmatprep.subr.mxu0 0.0
  %416 = vmatpush1.msra.mxu0 0.0
  %417 = vmatprep.subr.mxu0 0.0
  %418 = vmatpush1.msra.mxu0 0.0
  %419 = vmatprep.subr.mxu0 0.0
  %420 = vmatpush1.msra.mxu0 0.0
  %421 = vmatprep.subr.mxu0 0.0
  %422 = vmatpush1.msra.mxu0 0.0
  %423 = vmatprep.subr.mxu0 0.0
  %424 = vmatpush1.msra.mxu0 0.0
  %425 = vmatprep.subr.mxu0 0.0
  %426 = vmatpush1.msra.mxu0 0.0
  %427 = vmatprep.subr.mxu0 0.0
  %428 = vmatpush1.msra.mxu0 0.0
  %429 = vmatprep.subr.mxu0 0.0
  %430 = vmatpush1.msra.mxu0 0.0
  %431 = vmatprep.subr.mxu0 0.0
  %432 = vmatpush1.msra.mxu0 0.0
  %433 = vmatprep.subr.mxu0 0.0
  %434 = vmatpush1.msra.mxu0 0.0
  %435 = vmatprep.subr.mxu0 0.0
  %436 = vmatpush1.msra.mxu0 0.0
  %437 = vmatprep.subr.mxu0 0.0
  %438 = vmatpush1.msra.mxu0 0.0
  %439 = vmatprep.subr.mxu0 0.0
  %440 = vmatpush1.msra.mxu0 0.0
  %441 = vmatprep.subr.mxu0 0.0
  %442 = vmatpush1.msra.mxu0 0.0
  %443 = vmatprep.subr.mxu0 0.0
  %444 = vmatpush1.msra.mxu0 0.0
  %445 = vmatprep.subr.mxu0 0.0
  %446 = vmatpush1.msra.mxu0 0.0
  %447 = vmatprep.subr.mxu0 0.0
  %448 = vmatpush1.msra.mxu0 0.0
  %449 = vmatprep.subr.mxu0 0.0
  %450 = vmatpush1.msra.mxu0 0.0
  %451 = vmatprep.subr.mxu0 0.0
  %452 = vmatpush1.msra.mxu0 0.0
  %453 = vmatprep.subr.mxu0 0.0
  %454 = vmatpush1.msra.mxu0 0.0
  %455 = vmatprep.subr.mxu0 0.0
  %456 = vmatpush1.msra.mxu0 0.0
  %457 = vmatprep.subr.mxu0 0.0
  %458 = vmatpush1.msra.mxu0 0.0
  %459 = vmatprep.mubr.f32.mxu0 0.0
  %460 = vmatmul.mubr.f32.gmra.mrb[0].mxu0 %v393
  %v461 = vpop.f32.mrb[0].mxu0
  %v462 = vadd.f32 0.0, %v461
  %v463 = vpop.f32.mrb[0].mxu0
  %464 = vdwg.mxu0
  %v465 = vadd.f32 %v386, %v462
  %v466 = vtanh.pop %v465
  %467 = vst.msk [vmem:[#allocation3] sm:$0xff] %vm186, %v466
  %468 = vst.msk [vmem:[#allocation4] sm:$0xff] %vm186, %v466
  %v469 = vld [vmem:[#allocation4] sm:$0xff]
  %v470 = vld [vmem:[%s5] sm:$0xff]
  %v471 = vld [vmem:[%s5 + $0x8] sm:$0xff]
  %v472 = vld [vmem:[%s5 + $0x10] sm:$0xff]
  %v473 = vld [vmem:[%s5 + $0x18] sm:$0xff]
  %v474 = vld [vmem:[%s5 + $0x20] sm:$0xff]
  %v475 = vld [vmem:[%s5 + $0x28] sm:$0xff]
  %v476 = vld [vmem:[%s5 + $0x30] sm:$0xff]
  %v477 = vld [vmem:[%s5 + $0x38] sm:$0xff]
  %v478 = vld [vmem:[%s6] sm:$0x1]
  %v480 = vlaneseq
  %v481 = vshrl.u32 %v480, 7
  %v482 = vsub.s32 0, %v481
  %v483 = vrot.slane %v478, %v482
  %v486 = vsel %vm304, %v469, 0
  %488 = vmatprep.subr.mxu0 0.0
  %489 = vmatpush1.msra.mxu0 %v470
  %490 = vmatprep.subr.mxu0 0.0
  %491 = vmatpush1.msra.mxu0 %v471
  %492 = vmatprep.subr.mxu0 0.0
  %493 = vmatpush1.msra.mxu0 %v472
  %494 = vmatprep.subr.mxu0 0.0
  %495 = vmatpush1.msra.mxu0 %v473
  %496 = vmatprep.subr.mxu0 0.0
  %497 = vmatpush1.msra.mxu0 %v474
  %498 = vmatprep.subr.mxu0 0.0
  %499 = vmatpush1.msra.mxu0 %v475
  %500 = vmatprep.subr.mxu0 0.0
  %501 = vmatpush1.msra.mxu0 %v476
  %502 = vmatprep.subr.mxu0 0.0
  %503 = vmatpush1.msra.mxu0 %v477
  %504 = vmatprep.subr.mxu0 0.0
  %505 = vmatpush1.msra.mxu0 0.0
  %506 = vmatprep.subr.mxu0 0.0
  %507 = vmatpush1.msra.mxu0 0.0
  %508 = vmatprep.subr.mxu0 0.0
  %509 = vmatpush1.msra.mxu0 0.0
  %510 = vmatprep.subr.mxu0 0.0
  %511 = vmatpush1.msra.mxu0 0.0
  %512 = vmatprep.subr.mxu0 0.0
  %513 = vmatpush1.msra.mxu0 0.0
  %514 = vmatprep.subr.mxu0 0.0
  %515 = vmatpush1.msra.mxu0 0.0
  %516 = vmatprep.subr.mxu0 0.0
  %517 = vmatpush1.msra.mxu0 0.0
  %518 = vmatprep.subr.mxu0 0.0
  %519 = vmatpush1.msra.mxu0 0.0
  %520 = vmatprep.subr.mxu0 0.0
  %521 = vmatpush1.msra.mxu0 0.0
  %522 = vmatprep.subr.mxu0 0.0
  %523 = vmatpush1.msra.mxu0 0.0
  %524 = vmatprep.subr.mxu0 0.0
  %525 = vmatpush1.msra.mxu0 0.0
  %526 = vmatprep.subr.mxu0 0.0
  %527 = vmatpush1.msra.mxu0 0.0
  %528 = vmatprep.subr.mxu0 0.0
  %529 = vmatpush1.msra.mxu0 0.0
  %530 = vmatprep.subr.mxu0 0.0
  %531 = vmatpush1.msra.mxu0 0.0
  %532 = vmatprep.subr.mxu0 0.0
  %533 = vmatpush1.msra.mxu0 0.0
  %534 = vmatprep.subr.mxu0 0.0
  %535 = vmatpush1.msra.mxu0 0.0
  %536 = vmatprep.subr.mxu0 0.0
  %537 = vmatpush1.msra.mxu0 0.0
  %538 = vmatprep.subr.mxu0 0.0
  %539 = vmatpush1.msra.mxu0 0.0
  %540 = vmatprep.subr.mxu0 0.0
  %541 = vmatpush1.msra.mxu0 0.0
  %542 = vmatprep.subr.mxu0 0.0
  %543 = vmatpush1.msra.mxu0 0.0
  %544 = vmatprep.subr.mxu0 0.0
  %545 = vmatpush1.msra.mxu0 0.0
  %546 = vmatprep.subr.mxu0 0.0
  %547 = vmatpush1.msra.mxu0 0.0
  %548 = vmatprep.subr.mxu0 0.0
  %549 = vmatpush1.msra.mxu0 0.0
  %550 = vmatprep.subr.mxu0 0.0
  %551 = vmatpush1.msra.mxu0 0.0
  %552 = vmatprep.mubr.f32.mxu0 0.0
  %553 = vmatmul.mubr.f32.gmra.mrb[0].mxu0 %v486
  %v554 = vpop.f32.mrb[0].mxu0
  %v555 = vadd.f32 %v483, %v554
  %v556 = vpop.f32.mrb[0].mxu0
  %557 = vdwg.mxu0
  %v558 = vtanh.pop %v555
  %560 = vrot.lane.b32.xlu0 %v558, 32
  %v561 = vpop.permute.xlu0 %560
  %563 = vst.msk [vmem:[#allocation4] sm:$0xff] %vm203, %v561
  %s564 = scalar_lea.vmem [#allocation5], 8
  %565 = vst.msk [vmem:[%s564] sm:$0xff] %vm186, %v558
  %s566 = scalar_lea.vmem [#allocation2], 16
  %v567 = vld [vmem:[%s566] sm:$0xff]
  %v568 = vld [vmem:[#allocation3] sm:$0xff]
  %v569 = vld [vmem:[%s3] sm:$0xff]
  %v570 = vld [vmem:[%s3 + $0x8] sm:$0xff]
  %v571 = vld [vmem:[%s3 + $0x10] sm:$0xff]
  %v572 = vld [vmem:[%s3 + $0x18] sm:$0xff]
  %v574 = vsel %vm186, %v568, 0
  %576 = vmatprep.subr.mxu0 0.0
  %577 = vmatpush1.msra.mxu0 %v569
  %578 = vmatprep.subr.mxu0 0.0
  %579 = vmatpush1.msra.mxu0 %v570
  %580 = vmatprep.subr.mxu0 0.0
  %581 = vmatpush1.msra.mxu0 %v571
  %582 = vmatprep.subr.mxu0 0.0
  %583 = vmatpush1.msra.mxu0 %v572
  %584 = vmatprep.subr.mxu0 0.0
  %585 = vmatpush1.msra.mxu0 0.0
  %586 = vmatprep.subr.mxu0 0.0
  %587 = vmatpush1.msra.mxu0 0.0
  %588 = vmatprep.subr.mxu0 0.0
  %589 = vmatpush1.msra.mxu0 0.0
  %590 = vmatprep.subr.mxu0 0.0
  %591 = vmatpush1.msra.mxu0 0.0
  %592 = vmatprep.subr.mxu0 0.0
  %593 = vmatpush1.msra.mxu0 0.0
  %594 = vmatprep.subr.mxu0 0.0
  %595 = vmatpush1.msra.mxu0 0.0
  %596 = vmatprep.subr.mxu0 0.0
  %597 = vmatpush1.msra.mxu0 0.0
  %598 = vmatprep.subr.mxu0 0.0
  %599 = vmatpush1.msra.mxu0 0.0
  %600 = vmatprep.subr.mxu0 0.0
  %601 = vmatpush1.msra.mxu0 0.0
  %602 = vmatprep.subr.mxu0 0.0
  %603 = vmatpush1.msra.mxu0 0.0
  %604 = vmatprep.subr.mxu0 0.0
  %605 = vmatpush1.msra.mxu0 0.0
  %606 = vmatprep.subr.mxu0 0.0
  %607 = vmatpush1.msra.mxu0 0.0
  %608 = vmatprep.subr.mxu0 0.0
  %609 = vmatpush1.msra.mxu0 0.0
  %610 = vmatprep.subr.mxu0 0.0
  %611 = vmatpush1.msra.mxu0 0.0
  %612 = vmatprep.subr.mxu0 0.0
  %613 = vmatpush1.msra.mxu0 0.0
  %614 = vmatprep.subr.mxu0 0.0
  %615 = vmatpush1.msra.mxu0 0.0
  %616 = vmatprep.subr.mxu0 0.0
  %617 = vmatpush1.msra.mxu0 0.0
  %618 = vmatprep.subr.mxu0 0.0
  %619 = vmatpush1.msra.mxu0 0.0
  %620 = vmatprep.subr.mxu0 0.0
  %621 = vmatpush1.msra.mxu0 0.0
  %622 = vmatprep.subr.mxu0 0.0
  %623 = vmatpush1.msra.mxu0 0.0
  %624 = vmatprep.subr.mxu0 0.0
  %625 = vmatpush1.msra.mxu0 0.0
  %626 = vmatprep.subr.mxu0 0.0
  %627 = vmatpush1.msra.mxu0 0.0
  %628 = vmatprep.subr.mxu0 0.0
  %629 = vmatpush1.msra.mxu0 0.0
  %630 = vmatprep.subr.mxu0 0.0
  %631 = vmatpush1.msra.mxu0 0.0
  %632 = vmatprep.subr.mxu0 0.0
  %633 = vmatpush1.msra.mxu0 0.0
  %634 = vmatprep.subr.mxu0 0.0
  %635 = vmatpush1.msra.mxu0 0.0
  %636 = vmatprep.subr.mxu0 0.0
  %637 = vmatpush1.msra.mxu0 0.0
  %638 = vmatprep.subr.mxu0 0.0
  %639 = vmatpush1.msra.mxu0 0.0
  %640 = vmatprep.mubr.f32.mxu0 0.0
  %641 = vmatmul.mubr.f32.gmra.mrb[0].mxu0 %v574
  %v642 = vpop.f32.mrb[0].mxu0
  %v643 = vadd.f32 0.0, %v642
  %v644 = vpop.f32.mrb[0].mxu0
  %645 = vdwg.mxu0
  %v646 = vadd.f32 %v567, %v643
  %v647 = vtanh.pop %v646
  %648 = vst.msk [vmem:[#allocation3] sm:$0xff] %vm186, %v647
  %649 = vst.msk [vmem:[#allocation4] sm:$0xff] %vm186, %v647
  %v650 = vld [vmem:[#allocation4] sm:$0xff]
  %v651 = vld [vmem:[%s5] sm:$0xff]
  %v652 = vld [vmem:[%s5 + $0x8] sm:$0xff]
  %v653 = vld [vmem:[%s5 + $0x10] sm:$0xff]
  %v654 = vld [vmem:[%s5 + $0x18] sm:$0xff]
  %v655 = vld [vmem:[%s5 + $0x20] sm:$0xff]
  %v656 = vld [vmem:[%s5 + $0x28] sm:$0xff]
  %v657 = vld [vmem:[%s5 + $0x30] sm:$0xff]
  %v658 = vld [vmem:[%s5 + $0x38] sm:$0xff]
  %v659 = vld [vmem:[%s6] sm:$0x1]
  %v661 = vlaneseq
  %v662 = vshrl.u32 %v661, 7
  %v663 = vsub.s32 0, %v662
  %v664 = vrot.slane %v659, %v663
  %v667 = vsel %vm304, %v650, 0
  %669 = vmatprep.subr.mxu0 0.0
  %670 = vmatpush1.msra.mxu0 %v651
  %671 = vmatprep.subr.mxu0 0.0
  %672 = vmatpush1.msra.mxu0 %v652
  %673 = vmatprep.subr.mxu0 0.0
  %674 = vmatpush1.msra.mxu0 %v653
  %675 = vmatprep.subr.mxu0 0.0
  %676 = vmatpush1.msra.mxu0 %v654
  %677 = vmatprep.subr.mxu0 0.0
  %678 = vmatpush1.msra.mxu0 %v655
  %679 = vmatprep.subr.mxu0 0.0
  %680 = vmatpush1.msra.mxu0 %v656
  %681 = vmatprep.subr.mxu0 0.0
  %682 = vmatpush1.msra.mxu0 %v657
  %683 = vmatprep.subr.mxu0 0.0
  %684 = vmatpush1.msra.mxu0 %v658
  %685 = vmatprep.subr.mxu0 0.0
  %686 = vmatpush1.msra.mxu0 0.0
  %687 = vmatprep.subr.mxu0 0.0
  %688 = vmatpush1.msra.mxu0 0.0
  %689 = vmatprep.subr.mxu0 0.0
  %690 = vmatpush1.msra.mxu0 0.0
  %691 = vmatprep.subr.mxu0 0.0
  %692 = vmatpush1.msra.mxu0 0.0
  %693 = vmatprep.subr.mxu0 0.0
  %694 = vmatpush1.msra.mxu0 0.0
  %695 = vmatprep.subr.mxu0 0.0
  %696 = vmatpush1.msra.mxu0 0.0
  %697 = vmatprep.subr.mxu0 0.0
  %698 = vmatpush1.msra.mxu0 0.0
  %699 = vmatprep.subr.mxu0 0.0
  %700 = vmatpush1.msra.mxu0 0.0
  %701 = vmatprep.subr.mxu0 0.0
  %702 = vmatpush1.msra.mxu0 0.0
  %703 = vmatprep.subr.mxu0 0.0
  %704 = vmatpush1.msra.mxu0 0.0
  %705 = vmatprep.subr.mxu0 0.0
  %706 = vmatpush1.msra.mxu0 0.0
  %707 = vmatprep.subr.mxu0 0.0
  %708 = vmatpush1.msra.mxu0 0.0
  %709 = vmatprep.subr.mxu0 0.0
  %710 = vmatpush1.msra.mxu0 0.0
  %711 = vmatprep.subr.mxu0 0.0
  %712 = vmatpush1.msra.mxu0 0.0
  %713 = vmatprep.subr.mxu0 0.0
  %714 = vmatpush1.msra.mxu0 0.0
  %715 = vmatprep.subr.mxu0 0.0
  %716 = vmatpush1.msra.mxu0 0.0
  %717 = vmatprep.subr.mxu0 0.0
  %718 = vmatpush1.msra.mxu0 0.0
  %719 = vmatprep.subr.mxu0 0.0
  %720 = vmatpush1.msra.mxu0 0.0
  %721 = vmatprep.subr.mxu0 0.0
  %722 = vmatpush1.msra.mxu0 0.0
  %723 = vmatprep.subr.mxu0 0.0
  %724 = vmatpush1.msra.mxu0 0.0
  %725 = vmatprep.subr.mxu0 0.0
  %726 = vmatpush1.msra.mxu0 0.0
  %727 = vmatprep.subr.mxu0 0.0
  %728 = vmatpush1.msra.mxu0 0.0
  %729 = vmatprep.subr.mxu0 0.0
  %730 = vmatpush1.msra.mxu0 0.0
  %731 = vmatprep.subr.mxu0 0.0
  %732 = vmatpush1.msra.mxu0 0.0
  %733 = vmatprep.mubr.f32.mxu0 0.0
  %734 = vmatmul.mubr.f32.gmra.mrb[0].mxu0 %v667
  %v735 = vpop.f32.mrb[0].mxu0
  %v736 = vadd.f32 %v664, %v735
  %v737 = vpop.f32.mrb[0].mxu0
  %738 = vdwg.mxu0
  %v739 = vtanh.pop %v736
  %741 = vrot.lane.b32.xlu0 %v739, 32
  %v742 = vpop.permute.xlu0 %741
  %744 = vst.msk [vmem:[#allocation4] sm:$0xff] %vm203, %v742
  %s745 = scalar_lea.vmem [#allocation5], 16
  %746 = vst.msk [vmem:[%s745] sm:$0xff] %vm186, %v739
  %s747 = scalar_lea.vmem [#allocation2], 24
  %v748 = vld [vmem:[%s747] sm:$0xff]
  %v749 = vld [vmem:[#allocation3] sm:$0xff]
  %v750 = vld [vmem:[%s3] sm:$0xff]
  %v751 = vld [vmem:[%s3 + $0x8] sm:$0xff]
  %v752 = vld [vmem:[%s3 + $0x10] sm:$0xff]
  %v753 = vld [vmem:[%s3 + $0x18] sm:$0xff]
  %v755 = vsel %vm186, %v749, 0
  %757 = vmatprep.subr.mxu0 0.0
  %758 = vmatpush1.msra.mxu0 %v750
  %759 = vmatprep.subr.mxu0 0.0
  %760 = vmatpush1.msra.mxu0 %v751
  %761 = vmatprep.subr.mxu0 0.0
  %762 = vmatpush1.msra.mxu0 %v752
  %763 = vmatprep.subr.mxu0 0.0
  %764 = vmatpush1.msra.mxu0 %v753
  %765 = vmatprep.subr.mxu0 0.0
  %766 = vmatpush1.msra.mxu0 0.0
  %767 = vmatprep.subr.mxu0 0.0
  %768 = vmatpush1.msra.mxu0 0.0
  %769 = vmatprep.subr.mxu0 0.0
  %770 = vmatpush1.msra.mxu0 0.0
  %771 = vmatprep.subr.mxu0 0.0
  %772 = vmatpush1.msra.mxu0 0.0
  %773 = vmatprep.subr.mxu0 0.0
  %774 = vmatpush1.msra.mxu0 0.0
  %775 = vmatprep.subr.mxu0 0.0
  %776 = vmatpush1.msra.mxu0 0.0
  %777 = vmatprep.subr.mxu0 0.0
  %778 = vmatpush1.msra.mxu0 0.0
  %779 = vmatprep.subr.mxu0 0.0
  %780 = vmatpush1.msra.mxu0 0.0
  %781 = vmatprep.subr.mxu0 0.0
  %782 = vmatpush1.msra.mxu0 0.0
  %783 = vmatprep.subr.mxu0 0.0
  %784 = vmatpush1.msra.mxu0 0.0
  %785 = vmatprep.subr.mxu0 0.0
  %786 = vmatpush1.msra.mxu0 0.0
  %787 = vmatprep.subr.mxu0 0.0
  %788 = vmatpush1.msra.mxu0 0.0
  %789 = vmatprep.subr.mxu0 0.0
  %790 = vmatpush1.msra.mxu0 0.0
  %791 = vmatprep.subr.mxu0 0.0
  %792 = vmatpush1.msra.mxu0 0.0
  %793 = vmatprep.subr.mxu0 0.0
  %794 = vmatpush1.msra.mxu0 0.0
  %795 = vmatprep.subr.mxu0 0.0
  %796 = vmatpush1.msra.mxu0 0.0
  %797 = vmatprep.subr.mxu0 0.0
  %798 = vmatpush1.msra.mxu0 0.0
  %799 = vmatprep.subr.mxu0 0.0
  %800 = vmatpush1.msra.mxu0 0.0
  %801 = vmatprep.subr.mxu0 0.0
  %802 = vmatpush1.msra.mxu0 0.0
  %803 = vmatprep.subr.mxu0 0.0
  %804 = vmatpush1.msra.mxu0 0.0
  %805 = vmatprep.subr.mxu0 0.0
  %806 = vmatpush1.msra.mxu0 0.0
  %807 = vmatprep.subr.mxu0 0.0
  %808 = vmatpush1.msra.mxu0 0.0
  %809 = vmatprep.subr.mxu0 0.0
  %810 = vmatpush1.msra.mxu0 0.0
  %811 = vmatprep.subr.mxu0 0.0
  %812 = vmatpush1.msra.mxu0 0.0
  %813 = vmatprep.subr.mxu0 0.0
  %814 = vmatpush1.msra.mxu0 0.0
  %815 = vmatprep.subr.mxu0 0.0
  %816 = vmatpush1.msra.mxu0 0.0
  %817 = vmatprep.subr.mxu0 0.0
  %818 = vmatpush1.msra.mxu0 0.0
  %819 = vmatprep.subr.mxu0 0.0
  %820 = vmatpush1.msra.mxu0 0.0
  %821 = vmatprep.mubr.f32.mxu0 0.0
  %822 = vmatmul.mubr.f32.gmra.mrb[0].mxu0 %v755
  %v823 = vpop.f32.mrb[0].mxu0
  %v824 = vadd.f32 0.0, %v823
  %v825 = vpop.f32.mrb[0].mxu0
  %826 = vdwg.mxu0
  %v827 = vadd.f32 %v748, %v824
  %v828 = vtanh.pop %v827
  %829 = vst.msk [vmem:[#allocation3] sm:$0xff] %vm186, %v828
  %830 = vst.msk [vmem:[#allocation4] sm:$0xff] %vm186, %v828
  %v831 = vld [vmem:[#allocation4] sm:$0xff]
  %v832 = vld [vmem:[%s5] sm:$0xff]
  %v833 = vld [vmem:[%s5 + $0x8] sm:$0xff]
  %v834 = vld [vmem:[%s5 + $0x10] sm:$0xff]
  %v835 = vld [vmem:[%s5 + $0x18] sm:$0xff]
  %v836 = vld [vmem:[%s5 + $0x20] sm:$0xff]
  %v837 = vld [vmem:[%s5 + $0x28] sm:$0xff]
  %v838 = vld [vmem:[%s5 + $0x30] sm:$0xff]
  %v839 = vld [vmem:[%s5 + $0x38] sm:$0xff]
  %v840 = vld [vmem:[%s6] sm:$0x1]
  %v842 = vlaneseq
  %v843 = vshrl.u32 %v842, 7
  %v844 = vsub.s32 0, %v843
  %v845 = vrot.slane %v840, %v844
  %v848 = vsel %vm304, %v831, 0
  %850 = vmatprep.subr.mxu0 0.0
  %851 = vmatpush1.msra.mxu0 %v832
  %852 = vmatprep.subr.mxu0 0.0
  %853 = vmatpush1.msra.mxu0 %v833
  %854 = vmatprep.subr.mxu0 0.0
  %855 = vmatpush1.msra.mxu0 %v834
  %856 = vmatprep.subr.mxu0 0.0
  %857 = vmatpush1.msra.mxu0 %v835
  %858 = vmatprep.subr.mxu0 0.0
  %859 = vmatpush1.msra.mxu0 %v836
  %860 = vmatprep.subr.mxu0 0.0
  %861 = vmatpush1.msra.mxu0 %v837
  %862 = vmatprep.subr.mxu0 0.0
  %863 = vmatpush1.msra.mxu0 %v838
  %864 = vmatprep.subr.mxu0 0.0
  %865 = vmatpush1.msra.mxu0 %v839
  %866 = vmatprep.subr.mxu0 0.0
  %867 = vmatpush1.msra.mxu0 0.0
  %868 = vmatprep.subr.mxu0 0.0
  %869 = vmatpush1.msra.mxu0 0.0
  %870 = vmatprep.subr.mxu0 0.0
  %871 = vmatpush1.msra.mxu0 0.0
  %872 = vmatprep.subr.mxu0 0.0
  %873 = vmatpush1.msra.mxu0 0.0
  %874 = vmatprep.subr.mxu0 0.0
  %875 = vmatpush1.msra.mxu0 0.0
  %876 = vmatprep.subr.mxu0 0.0
  %877 = vmatpush1.msra.mxu0 0.0
  %878 = vmatprep.subr.mxu0 0.0
  %879 = vmatpush1.msra.mxu0 0.0
  %880 = vmatprep.subr.mxu0 0.0
  %881 = vmatpush1.msra.mxu0 0.0
  %882 = vmatprep.subr.mxu0 0.0
  %883 = vmatpush1.msra.mxu0 0.0
  %884 = vmatprep.subr.mxu0 0.0
  %885 = vmatpush1.msra.mxu0 0.0
  %886 = vmatprep.subr.mxu0 0.0
  %887 = vmatpush1.msra.mxu0 0.0
  %888 = vmatprep.subr.mxu0 0.0
  %889 = vmatpush1.msra.mxu0 0.0
  %890 = vmatprep.subr.mxu0 0.0
  %891 = vmatpush1.msra.mxu0 0.0
  %892 = vmatprep.subr.mxu0 0.0
  %893 = vmatpush1.msra.mxu0 0.0
  %894 = vmatprep.subr.mxu0 0.0
  %895 = vmatpush1.msra.mxu0 0.0
  %896 = vmatprep.subr.mxu0 0.0
  %897 = vmatpush1.msra.mxu0 0.0
  %898 = vmatprep.subr.mxu0 0.0
  %899 = vmatpush1.msra.mxu0 0.0
  %900 = vmatprep.subr.mxu0 0.0
  %901 = vmatpush1.msra.mxu0 0.0
  %902 = vmatprep.subr.mxu0 0.0
  %903 = vmatpush1.msra.mxu0 0.0
  %904 = vmatprep.subr.mxu0 0.0
  %905 = vmatpush1.msra.mxu0 0.0
  %906 = vmatprep.subr.mxu0 0.0
  %907 = vmatpush1.msra.mxu0 0.0
  %908 = vmatprep.subr.mxu0 0.0
  %909 = vmatpush1.msra.mxu0 0.0
  %910 = vmatprep.subr.mxu0 0.0
  %911 = vmatpush1.msra.mxu0 0.0
  %912 = vmatprep.subr.mxu0 0.0
  %913 = vmatpush1.msra.mxu0 0.0
  %914 = vmatprep.mubr.f32.mxu0 0.0
  %915 = vmatmul.mubr.f32.gmra.mrb[0].mxu0 %v848
  %v916 = vpop.f32.mrb[0].mxu0
  %v917 = vadd.f32 %v845, %v916
  %v918 = vpop.f32.mrb[0].mxu0
  %919 = vdwg.mxu0
  %v920 = vtanh.pop %v917
  %922 = vrot.lane.b32.xlu0 %v920, 32
  %v923 = vpop.permute.xlu0 %922
  %925 = vst.msk [vmem:[#allocation4] sm:$0xff] %vm203, %v923
  %s926 = scalar_lea.vmem [#allocation5], 24
  %927 = vst.msk [vmem:[%s926] sm:$0xff] %vm186, %v920
  %s928 = scalar_lea.vmem [#allocation2], 32
  %v929 = vld [vmem:[%s928] sm:$0xff]
  %v930 = vld [vmem:[#allocation3] sm:$0xff]
  %v931 = vld [vmem:[%s3] sm:$0xff]
  %v932 = vld [vmem:[%s3 + $0x8] sm:$0xff]
  %v933 = vld [vmem:[%s3 + $0x10] sm:$0xff]
  %v934 = vld [vmem:[%s3 + $0x18] sm:$0xff]
  %v936 = vsel %vm186, %v930, 0
  %938 = vmatprep.subr.mxu0 0.0
  %939 = vmatpush1.msra.mxu0 %v931
  %940 = vmatprep.subr.mxu0 0.0
  %941 = vmatpush1.msra.mxu0 %v932
  %942 = vmatprep.subr.mxu0 0.0
  %943 = vmatpush1.msra.mxu0 %v933
  %944 = vmatprep.subr.mxu0 0.0
  %945 = vmatpush1.msra.mxu0 %v934
  %946 = vmatprep.subr.mxu0 0.0
  %947 = vmatpush1.msra.mxu0 0.0
  %948 = vmatprep.subr.mxu0 0.0
  %949 = vmatpush1.msra.mxu0 0.0
  %950 = vmatprep.subr.mxu0 0.0
  %951 = vmatpush1.msra.mxu0 0.0
  %952 = vmatprep.subr.mxu0 0.0
  %953 = vmatpush1.msra.mxu0 0.0
  %954 = vmatprep.subr.mxu0 0.0
  %955 = vmatpush1.msra.mxu0 0.0
  %956 = vmatprep.subr.mxu0 0.0
  %957 = vmatpush1.msra.mxu0 0.0
  %958 = vmatprep.subr.mxu0 0.0
  %959 = vmatpush1.msra.mxu0 0.0
  %960 = vmatprep.subr.mxu0 0.0
  %961 = vmatpush1.msra.mxu0 0.0
  %962 = vmatprep.subr.mxu0 0.0
  %963 = vmatpush1.msra.mxu0 0.0
  %964 = vmatprep.subr.mxu0 0.0
  %965 = vmatpush1.msra.mxu0 0.0
  %966 = vmatprep.subr.mxu0 0.0
  %967 = vmatpush1.msra.mxu0 0.0
  %968 = vmatprep.subr.mxu0 0.0
  %969 = vmatpush1.msra.mxu0 0.0
  %970 = vmatprep.subr.mxu0 0.0
  %971 = vmatpush1.msra.mxu0 0.0
  %972 = vmatprep.subr.mxu0 0.0
  %973 = vmatpush1.msra.mxu0 0.0
  %974 = vmatprep.subr.mxu0 0.0
  %975 = vmatpush1.msra.mxu0 0.0
  %976 = vmatprep.subr.mxu0 0.0
  %977 = vmatpush1.msra.mxu0 0.0
  %978 = vmatprep.subr.mxu0 0.0
  %979 = vmatpush1.msra.mxu0 0.0
  %980 = vmatprep.subr.mxu0 0.0
  %981 = vmatpush1.msra.mxu0 0.0
  %982 = vmatprep.subr.mxu0 0.0
  %983 = vmatpush1.msra.mxu0 0.0
  %984 = vmatprep.subr.mxu0 0.0
  %985 = vmatpush1.msra.mxu0 0.0
  %986 = vmatprep.subr.mxu0 0.0
  %987 = vmatpush1.msra.mxu0 0.0
  %988 = vmatprep.subr.mxu0 0.0
  %989 = vmatpush1.msra.mxu0 0.0
  %990 = vmatprep.subr.mxu0 0.0
  %991 = vmatpush1.msra.mxu0 0.0
  %992 = vmatprep.subr.mxu0 0.0
  %993 = vmatpush1.msra.mxu0 0.0
  %994 = vmatprep.subr.mxu0 0.0
  %995 = vmatpush1.msra.mxu0 0.0
  %996 = vmatprep.subr.mxu0 0.0
  %997 = vmatpush1.msra.mxu0 0.0
  %998 = vmatprep.subr.mxu0 0.0
  %999 = vmatpush1.msra.mxu0 0.0
  %1000 = vmatprep.subr.mxu0 0.0
  %1001 = vmatpush1.msra.mxu0 0.0
  %1002 = vmatprep.mubr.f32.mxu0 0.0
  %1003 = vmatmul.mubr.f32.gmra.mrb[0].mxu0 %v936
  %v1004 = vpop.f32.mrb[0].mxu0
  %v1005 = vadd.f32 0.0, %v1004
  %v1006 = vpop.f32.mrb[0].mxu0
  %1007 = vdwg.mxu0
  %v1008 = vadd.f32 %v929, %v1005
  %v1009 = vtanh.pop %v1008
  %1010 = vst.msk [vmem:[#allocation3] sm:$0xff] %vm186, %v1009
  %1011 = vst.msk [vmem:[#allocation4] sm:$0xff] %vm186, %v1009
  %v1012 = vld [vmem:[#allocation4] sm:$0xff]
  %v1013 = vld [vmem:[%s5] sm:$0xff]
  %v1014 = vld [vmem:[%s5 + $0x8] sm:$0xff]
  %v1015 = vld [vmem:[%s5 + $0x10] sm:$0xff]
  %v1016 = vld [vmem:[%s5 + $0x18] sm:$0xff]
  %v1017 = vld [vmem:[%s5 + $0x20] sm:$0xff]
  %v1018 = vld [vmem:[%s5 + $0x28] sm:$0xff]
  %v1019 = vld [vmem:[%s5 + $0x30] sm:$0xff]
  %v1020 = vld [vmem:[%s5 + $0x38] sm:$0xff]
  %v1021 = vld [vmem:[%s6] sm:$0x1]
  %v1023 = vlaneseq
  %v1024 = vshrl.u32 %v1023, 7
  %v1025 = vsub.s32 0, %v1024
  %v1026 = vrot.slane %v1021, %v1025
  %v1029 = vsel %vm304, %v1012, 0
  %1031 = vmatprep.subr.mxu0 0.0
  %1032 = vmatpush1.msra.mxu0 %v1013
  %1033 = vmatprep.subr.mxu0 0.0
  %1034 = vmatpush1.msra.mxu0 %v1014
  %1035 = vmatprep.subr.mxu0 0.0
  %1036 = vmatpush1.msra.mxu0 %v1015
  %1037 = vmatprep.subr.mxu0 0.0
  %1038 = vmatpush1.msra.mxu0 %v1016
  %1039 = vmatprep.subr.mxu0 0.0
  %1040 = vmatpush1.msra.mxu0 %v1017
  %1041 = vmatprep.subr.mxu0 0.0
  %1042 = vmatpush1.msra.mxu0 %v1018
  %1043 = vmatprep.subr.mxu0 0.0
  %1044 = vmatpush1.msra.mxu0 %v1019
  %1045 = vmatprep.subr.mxu0 0.0
  %1046 = vmatpush1.msra.mxu0 %v1020
  %1047 = vmatprep.subr.mxu0 0.0
  %1048 = vmatpush1.msra.mxu0 0.0
  %1049 = vmatprep.subr.mxu0 0.0
  %1050 = vmatpush1.msra.mxu0 0.0
  %1051 = vmatprep.subr.mxu0 0.0
  %1052 = vmatpush1.msra.mxu0 0.0
  %1053 = vmatprep.subr.mxu0 0.0
  %1054 = vmatpush1.msra.mxu0 0.0
  %1055 = vmatprep.subr.mxu0 0.0
  %1056 = vmatpush1.msra.mxu0 0.0
  %1057 = vmatprep.subr.mxu0 0.0
  %1058 = vmatpush1.msra.mxu0 0.0
  %1059 = vmatprep.subr.mxu0 0.0
  %1060 = vmatpush1.msra.mxu0 0.0
  %1061 = vmatprep.subr.mxu0 0.0
  %1062 = vmatpush1.msra.mxu0 0.0
  %1063 = vmatprep.subr.mxu0 0.0
  %1064 = vmatpush1.msra.mxu0 0.0
  %1065 = vmatprep.subr.mxu0 0.0
  %1066 = vmatpush1.msra.mxu0 0.0
  %1067 = vmatprep.subr.mxu0 0.0
  %1068 = vmatpush1.msra.mxu0 0.0
  %1069 = vmatprep.subr.mxu0 0.0
  %1070 = vmatpush1.msra.mxu0 0.0
  %1071 = vmatprep.subr.mxu0 0.0
  %1072 = vmatpush1.msra.mxu0 0.0
  %1073 = vmatprep.subr.mxu0 0.0
  %1074 = vmatpush1.msra.mxu0 0.0
  %1075 = vmatprep.subr.mxu0 0.0
  %1076 = vmatpush1.msra.mxu0 0.0
  %1077 = vmatprep.subr.mxu0 0.0
  %1078 = vmatpush1.msra.mxu0 0.0
  %1079 = vmatprep.subr.mxu0 0.0
  %1080 = vmatpush1.msra.mxu0 0.0
  %1081 = vmatprep.subr.mxu0 0.0
  %1082 = vmatpush1.msra.mxu0 0.0
  %1083 = vmatprep.subr.mxu0 0.0
  %1084 = vmatpush1.msra.mxu0 0.0
  %1085 = vmatprep.subr.mxu0 0.0
  %1086 = vmatpush1.msra.mxu0 0.0
  %1087 = vmatprep.subr.mxu0 0.0
  %1088 = vmatpush1.msra.mxu0 0.0
  %1089 = vmatprep.subr.mxu0 0.0
  %1090 = vmatpush1.msra.mxu0 0.0
  %1091 = vmatprep.subr.mxu0 0.0
  %1092 = vmatpush1.msra.mxu0 0.0
  %1093 = vmatprep.subr.mxu0 0.0
  %1094 = vmatpush1.msra.mxu0 0.0
  %1095 = vmatprep.mubr.f32.mxu0 0.0
  %1096 = vmatmul.mubr.f32.gmra.mrb[0].mxu0 %v1029
  %v1097 = vpop.f32.mrb[0].mxu0
  %v1098 = vadd.f32 %v1026, %v1097
  %v1099 = vpop.f32.mrb[0].mxu0
  %1100 = vdwg.mxu0
  %v1101 = vtanh.pop %v1098
  %1103 = vrot.lane.b32.xlu0 %v1101, 32
  %v1104 = vpop.permute.xlu0 %1103
  %1106 = vst.msk [vmem:[#allocation4] sm:$0xff] %vm203, %v1104
  %s1107 = scalar_lea.vmem [#allocation5], 32
  %1108 = vst.msk [vmem:[%s1107] sm:$0xff] %vm186, %v1101
  %s1109 = scalar_lea.vmem [#allocation2], 40
  %v1110 = vld [vmem:[%s1109] sm:$0xff]
  %v1111 = vld [vmem:[#allocation3] sm:$0xff]
  %v1112 = vld [vmem:[%s3] sm:$0xff]
  %v1113 = vld [vmem:[%s3 + $0x8] sm:$0xff]
  %v1114 = vld [vmem:[%s3 + $0x10] sm:$0xff]
  %v1115 = vld [vmem:[%s3 + $0x18] sm:$0xff]
  %v1117 = vsel %vm186, %v1111, 0
  %1119 = vmatprep.subr.mxu0 0.0
  %1120 = vmatpush1.msra.mxu0 %v1112
  %1121 = vmatprep.subr.mxu0 0.0
  %1122 = vmatpush1.msra.mxu0 %v1113
  %1123 = vmatprep.subr.mxu0 0.0
  %1124 = vmatpush1.msra.mxu0 %v1114
  %1125 = vmatprep.subr.mxu0 0.0
  %1126 = vmatpush1.msra.mxu0 %v1115
  %1127 = vmatprep.subr.mxu0 0.0
  %1128 = vmatpush1.msra.mxu0 0.0
  %1129 = vmatprep.subr.mxu0 0.0
  %1130 = vmatpush1.msra.mxu0 0.0
  %1131 = vmatprep.subr.mxu0 0.0
  %1132 = vmatpush1.msra.mxu0 0.0
  %1133 = vmatprep.subr.mxu0 0.0
  %1134 = vmatpush1.msra.mxu0 0.0
  %1135 = vmatprep.subr.mxu0 0.0
  %1136 = vmatpush1.msra.mxu0 0.0
  %1137 = vmatprep.subr.mxu0 0.0
  %1138 = vmatpush1.msra.mxu0 0.0
  %1139 = vmatprep.subr.mxu0 0.0
  %1140 = vmatpush1.msra.mxu0 0.0
  %1141 = vmatprep.subr.mxu0 0.0
  %1142 = vmatpush1.msra.mxu0 0.0
  %1143 = vmatprep.subr.mxu0 0.0
  %1144 = vmatpush1.msra.mxu0 0.0
  %1145 = vmatprep.subr.mxu0 0.0
  %1146 = vmatpush1.msra.mxu0 0.0
  %1147 = vmatprep.subr.mxu0 0.0
  %1148 = vmatpush1.msra.mxu0 0.0
  %1149 = vmatprep.subr.mxu0 0.0
  %1150 = vmatpush1.msra.mxu0 0.0
  %1151 = vmatprep.subr.mxu0 0.0
  %1152 = vmatpush1.msra.mxu0 0.0
  %1153 = vmatprep.subr.mxu0 0.0
  %1154 = vmatpush1.msra.mxu0 0.0
  %1155 = vmatprep.subr.mxu0 0.0
  %1156 = vmatpush1.msra.mxu0 0.0
  %1157 = vmatprep.subr.mxu0 0.0
  %1158 = vmatpush1.msra.mxu0 0.0
  %1159 = vmatprep.subr.mxu0 0.0
  %1160 = vmatpush1.msra.mxu0 0.0
  %1161 = vmatprep.subr.mxu0 0.0
  %1162 = vmatpush1.msra.mxu0 0.0
  %1163 = vmatprep.subr.mxu0 0.0
  %1164 = vmatpush1.msra.mxu0 0.0
  %1165 = vmatprep.subr.mxu0 0.0
  %1166 = vmatpush1.msra.mxu0 0.0
  %1167 = vmatprep.subr.mxu0 0.0
  %1168 = vmatpush1.msra.mxu0 0.0
  %1169 = vmatprep.subr.mxu0 0.0
  %1170 = vmatpush1.msra.mxu0 0.0
  %1171 = vmatprep.subr.mxu0 0.0
  %1172 = vmatpush1.msra.mxu0 0.0
  %1173 = vmatprep.subr.mxu0 0.0
  %1174 = vmatpush1.msra.mxu0 0.0
  %1175 = vmatprep.subr.mxu0 0.0
  %1176 = vmatpush1.msra.mxu0 0.0
  %1177 = vmatprep.subr.mxu0 0.0
  %1178 = vmatpush1.msra.mxu0 0.0
  %1179 = vmatprep.subr.mxu0 0.0
  %1180 = vmatpush1.msra.mxu0 0.0
  %1181 = vmatprep.subr.mxu0 0.0
  %1182 = vmatpush1.msra.mxu0 0.0
  %1183 = vmatprep.mubr.f32.mxu0 0.0
  %1184 = vmatmul.mubr.f32.gmra.mrb[0].mxu0 %v1117
  %v1185 = vpop.f32.mrb[0].mxu0
  %v1186 = vadd.f32 0.0, %v1185
  %v1187 = vpop.f32.mrb[0].mxu0
  %1188 = vdwg.mxu0
  %v1189 = vadd.f32 %v1110, %v1186
  %v1190 = vtanh.pop %v1189
  %1191 = vst.msk [vmem:[#allocation3] sm:$0xff] %vm186, %v1190
  %1192 = vst.msk [vmem:[#allocation4] sm:$0xff] %vm186, %v1190
  %v1193 = vld [vmem:[#allocation4] sm:$0xff]
  %v1194 = vld [vmem:[%s5] sm:$0xff]
  %v1195 = vld [vmem:[%s5 + $0x8] sm:$0xff]
  %v1196 = vld [vmem:[%s5 + $0x10] sm:$0xff]
  %v1197 = vld [vmem:[%s5 + $0x18] sm:$0xff]
  %v1198 = vld [vmem:[%s5 + $0x20] sm:$0xff]
  %v1199 = vld [vmem:[%s5 + $0x28] sm:$0xff]
  %v1200 = vld [vmem:[%s5 + $0x30] sm:$0xff]
  %v1201 = vld [vmem:[%s5 + $0x38] sm:$0xff]
  %v1202 = vld [vmem:[%s6] sm:$0x1]
  %v1204 = vlaneseq
  %v1205 = vshrl.u32 %v1204, 7
  %v1206 = vsub.s32 0, %v1205
  %v1207 = vrot.slane %v1202, %v1206
  %v1210 = vsel %vm304, %v1193, 0
  %1212 = vmatprep.subr.mxu0 0.0
  %1213 = vmatpush1.msra.mxu0 %v1194
  %1214 = vmatprep.subr.mxu0 0.0
  %1215 = vmatpush1.msra.mxu0 %v1195
  %1216 = vmatprep.subr.mxu0 0.0
  %1217 = vmatpush1.msra.mxu0 %v1196
  %1218 = vmatprep.subr.mxu0 0.0
  %1219 = vmatpush1.msra.mxu0 %v1197
  %1220 = vmatprep.subr.mxu0 0.0
  %1221 = vmatpush1.msra.mxu0 %v1198
  %1222 = vmatprep.subr.mxu0 0.0
  %1223 = vmatpush1.msra.mxu0 %v1199
  %1224 = vmatprep.subr.mxu0 0.0
  %1225 = vmatpush1.msra.mxu0 %v1200
  %1226 = vmatprep.subr.mxu0 0.0
  %1227 = vmatpush1.msra.mxu0 %v1201
  %1228 = vmatprep.subr.mxu0 0.0
  %1229 = vmatpush1.msra.mxu0 0.0
  %1230 = vmatprep.subr.mxu0 0.0
  %1231 = vmatpush1.msra.mxu0 0.0
  %1232 = vmatprep.subr.mxu0 0.0
  %1233 = vmatpush1.msra.mxu0 0.0
  %1234 = vmatprep.subr.mxu0 0.0
  %1235 = vmatpush1.msra.mxu0 0.0
  %1236 = vmatprep.subr.mxu0 0.0
  %1237 = vmatpush1.msra.mxu0 0.0
  %1238 = vmatprep.subr.mxu0 0.0
  %1239 = vmatpush1.msra.mxu0 0.0
  %1240 = vmatprep.subr.mxu0 0.0
  %1241 = vmatpush1.msra.mxu0 0.0
  %1242 = vmatprep.subr.mxu0 0.0
  %1243 = vmatpush1.msra.mxu0 0.0
  %1244 = vmatprep.subr.mxu0 0.0
  %1245 = vmatpush1.msra.mxu0 0.0
  %1246 = vmatprep.subr.mxu0 0.0
  %1247 = vmatpush1.msra.mxu0 0.0
  %1248 = vmatprep.subr.mxu0 0.0
  %1249 = vmatpush1.msra.mxu0 0.0
  %1250 = vmatprep.subr.mxu0 0.0
  %1251 = vmatpush1.msra.mxu0 0.0
  %1252 = vmatprep.subr.mxu0 0.0
  %1253 = vmatpush1.msra.mxu0 0.0
  %1254 = vmatprep.subr.mxu0 0.0
  %1255 = vmatpush1.msra.mxu0 0.0
  %1256 = vmatprep.subr.mxu0 0.0
  %1257 = vmatpush1.msra.mxu0 0.0
  %1258 = vmatprep.subr.mxu0 0.0
  %1259 = vmatpush1.msra.mxu0 0.0
  %1260 = vmatprep.subr.mxu0 0.0
  %1261 = vmatpush1.msra.mxu0 0.0
  %1262 = vmatprep.subr.mxu0 0.0
  %1263 = vmatpush1.msra.mxu0 0.0
  %1264 = vmatprep.subr.mxu0 0.0
  %1265 = vmatpush1.msra.mxu0 0.0
  %1266 = vmatprep.subr.mxu0 0.0
  %1267 = vmatpush1.msra.mxu0 0.0
  %1268 = vmatprep.subr.mxu0 0.0
  %1269 = vmatpush1.msra.mxu0 0.0
  %1270 = vmatprep.subr.mxu0 0.0
  %1271 = vmatpush1.msra.mxu0 0.0
  %1272 = vmatprep.subr.mxu0 0.0
  %1273 = vmatpush1.msra.mxu0 0.0
  %1274 = vmatprep.subr.mxu0 0.0
  %1275 = vmatpush1.msra.mxu0 0.0
  %1276 = vmatprep.mubr.f32.mxu0 0.0
  %1277 = vmatmul.mubr.f32.gmra.mrb[0].mxu0 %v1210
  %v1278 = vpop.f32.mrb[0].mxu0
  %v1279 = vadd.f32 %v1207, %v1278
  %v1280 = vpop.f32.mrb[0].mxu0
  %1281 = vdwg.mxu0
  %v1282 = vtanh.pop %v1279
  %1284 = vrot.lane.b32.xlu0 %v1282, 32
  %v1285 = vpop.permute.xlu0 %1284
  %1287 = vst.msk [vmem:[#allocation4] sm:$0xff] %vm203, %v1285
  %s1288 = scalar_lea.vmem [#allocation5], 40
  %1289 = vst.msk [vmem:[%s1288] sm:$0xff] %vm186, %v1282
  %s1290 = scalar_lea.vmem [#allocation2], 48
  %v1291 = vld [vmem:[%s1290] sm:$0xff]
  %v1292 = vld [vmem:[#allocation3] sm:$0xff]
  %v1293 = vld [vmem:[%s3] sm:$0xff]
  %v1294 = vld [vmem:[%s3 + $0x8] sm:$0xff]
  %v1295 = vld [vmem:[%s3 + $0x10] sm:$0xff]
  %v1296 = vld [vmem:[%s3 + $0x18] sm:$0xff]
  %v1298 = vsel %vm186, %v1292, 0
  %1300 = vmatprep.subr.mxu0 0.0
  %1301 = vmatpush1.msra.mxu0 %v1293
  %1302 = vmatprep.subr.mxu0 0.0
  %1303 = vmatpush1.msra.mxu0 %v1294
  %1304 = vmatprep.subr.mxu0 0.0
  %1305 = vmatpush1.msra.mxu0 %v1295
  %1306 = vmatprep.subr.mxu0 0.0
  %1307 = vmatpush1.msra.mxu0 %v1296
  %1308 = vmatprep.subr.mxu0 0.0
  %1309 = vmatpush1.msra.mxu0 0.0
  %1310 = vmatprep.subr.mxu0 0.0
  %1311 = vmatpush1.msra.mxu0 0.0
  %1312 = vmatprep.subr.mxu0 0.0
  %1313 = vmatpush1.msra.mxu0 0.0
  %1314 = vmatprep.subr.mxu0 0.0
  %1315 = vmatpush1.msra.mxu0 0.0
  %1316 = vmatprep.subr.mxu0 0.0
  %1317 = vmatpush1.msra.mxu0 0.0
  %1318 = vmatprep.subr.mxu0 0.0
  %1319 = vmatpush1.msra.mxu0 0.0
  %1320 = vmatprep.subr.mxu0 0.0
  %1321 = vmatpush1.msra.mxu0 0.0
  %1322 = vmatprep.subr.mxu0 0.0
  %1323 = vmatpush1.msra.mxu0 0.0
  %1324 = vmatprep.subr.mxu0 0.0
  %1325 = vmatpush1.msra.mxu0 0.0
  %1326 = vmatprep.subr.mxu0 0.0
  %1327 = vmatpush1.msra.mxu0 0.0
  %1328 = vmatprep.subr.mxu0 0.0
  %1329 = vmatpush1.msra.mxu0 0.0
  %1330 = vmatprep.subr.mxu0 0.0
  %1331 = vmatpush1.msra.mxu0 0.0
  %1332 = vmatprep.subr.mxu0 0.0
  %1333 = vmatpush1.msra.mxu0 0.0
  %1334 = vmatprep.subr.mxu0 0.0
  %1335 = vmatpush1.msra.mxu0 0.0
  %1336 = vmatprep.subr.mxu0 0.0
  %1337 = vmatpush1.msra.mxu0 0.0
  %1338 = vmatprep.subr.mxu0 0.0
  %1339 = vmatpush1.msra.mxu0 0.0
  %1340 = vmatprep.subr.mxu0 0.0
  %1341 = vmatpush1.msra.mxu0 0.0
  %1342 = vmatprep.subr.mxu0 0.0
  %1343 = vmatpush1.msra.mxu0 0.0
  %1344 = vmatprep.subr.mxu0 0.0
  %1345 = vmatpush1.msra.mxu0 0.0
  %1346 = vmatprep.subr.mxu0 0.0
  %1347 = vmatpush1.msra.mxu0 0.0
  %1348 = vmatprep.subr.mxu0 0.0
  %1349 = vmatpush1.msra.mxu0 0.0
  %1350 = vmatprep.subr.mxu0 0.0
  %1351 = vmatpush1.msra.mxu0 0.0
  %1352 = vmatprep.subr.mxu0 0.0
  %1353 = vmatpush1.msra.mxu0 0.0
  %1354 = vmatprep.subr.mxu0 0.0
  %1355 = vmatpush1.msra.mxu0 0.0
  %1356 = vmatprep.subr.mxu0 0.0
  %1357 = vmatpush1.msra.mxu0 0.0
  %1358 = vmatprep.subr.mxu0 0.0
  %1359 = vmatpush1.msra.mxu0 0.0
  %1360 = vmatprep.subr.mxu0 0.0
  %1361 = vmatpush1.msra.mxu0 0.0
  %1362 = vmatprep.subr.mxu0 0.0
  %1363 = vmatpush1.msra.mxu0 0.0
  %1364 = vmatprep.mubr.f32.mxu0 0.0
  %1365 = vmatmul.mubr.f32.gmra.mrb[0].mxu0 %v1298
  %v1366 = vpop.f32.mrb[0].mxu0
  %v1367 = vadd.f32 0.0, %v1366
  %v1368 = vpop.f32.mrb[0].mxu0
  %1369 = vdwg.mxu0
  %v1370 = vadd.f32 %v1291, %v1367
  %v1371 = vtanh.pop %v1370
  %1372 = vst.msk [vmem:[#allocation3] sm:$0xff] %vm186, %v1371
  %1373 = vst.msk [vmem:[#allocation4] sm:$0xff] %vm186, %v1371
  %v1374 = vld [vmem:[#allocation4] sm:$0xff]
  %v1375 = vld [vmem:[%s5] sm:$0xff]
  %v1376 = vld [vmem:[%s5 + $0x8] sm:$0xff]
  %v1377 = vld [vmem:[%s5 + $0x10] sm:$0xff]
  %v1378 = vld [vmem:[%s5 + $0x18] sm:$0xff]
  %v1379 = vld [vmem:[%s5 + $0x20] sm:$0xff]
  %v1380 = vld [vmem:[%s5 + $0x28] sm:$0xff]
  %v1381 = vld [vmem:[%s5 + $0x30] sm:$0xff]
  %v1382 = vld [vmem:[%s5 + $0x38] sm:$0xff]
  %v1383 = vld [vmem:[%s6] sm:$0x1]
  %v1385 = vlaneseq
  %v1386 = vshrl.u32 %v1385, 7
  %v1387 = vsub.s32 0, %v1386
  %v1388 = vrot.slane %v1383, %v1387
  %v1391 = vsel %vm304, %v1374, 0
  %1393 = vmatprep.subr.mxu0 0.0
  %1394 = vmatpush1.msra.mxu0 %v1375
  %1395 = vmatprep.subr.mxu0 0.0
  %1396 = vmatpush1.msra.mxu0 %v1376
  %1397 = vmatprep.subr.mxu0 0.0
  %1398 = vmatpush1.msra.mxu0 %v1377
  %1399 = vmatprep.subr.mxu0 0.0
  %1400 = vmatpush1.msra.mxu0 %v1378
  %1401 = vmatprep.subr.mxu0 0.0
  %1402 = vmatpush1.msra.mxu0 %v1379
  %1403 = vmatprep.subr.mxu0 0.0
  %1404 = vmatpush1.msra.mxu0 %v1380
  %1405 = vmatprep.subr.mxu0 0.0
  %1406 = vmatpush1.msra.mxu0 %v1381
  %1407 = vmatprep.subr.mxu0 0.0
  %1408 = vmatpush1.msra.mxu0 %v1382
  %1409 = vmatprep.subr.mxu0 0.0
  %1410 = vmatpush1.msra.mxu0 0.0
  %1411 = vmatprep.subr.mxu0 0.0
  %1412 = vmatpush1.msra.mxu0 0.0
  %1413 = vmatprep.subr.mxu0 0.0
  %1414 = vmatpush1.msra.mxu0 0.0
  %1415 = vmatprep.subr.mxu0 0.0
  %1416 = vmatpush1.msra.mxu0 0.0
  %1417 = vmatprep.subr.mxu0 0.0
  %1418 = vmatpush1.msra.mxu0 0.0
  %1419 = vmatprep.subr.mxu0 0.0
  %1420 = vmatpush1.msra.mxu0 0.0
  %1421 = vmatprep.subr.mxu0 0.0
  %1422 = vmatpush1.msra.mxu0 0.0
  %1423 = vmatprep.subr.mxu0 0.0
  %1424 = vmatpush1.msra.mxu0 0.0
  %1425 = vmatprep.subr.mxu0 0.0
  %1426 = vmatpush1.msra.mxu0 0.0
  %1427 = vmatprep.subr.mxu0 0.0
  %1428 = vmatpush1.msra.mxu0 0.0
  %1429 = vmatprep.subr.mxu0 0.0
  %1430 = vmatpush1.msra.mxu0 0.0
  %1431 = vmatprep.subr.mxu0 0.0
  %1432 = vmatpush1.msra.mxu0 0.0
  %1433 = vmatprep.subr.mxu0 0.0
  %1434 = vmatpush1.msra.mxu0 0.0
  %1435 = vmatprep.subr.mxu0 0.0
  %1436 = vmatpush1.msra.mxu0 0.0
  %1437 = vmatprep.subr.mxu0 0.0
  %1438 = vmatpush1.msra.mxu0 0.0
  %1439 = vmatprep.subr.mxu0 0.0
  %1440 = vmatpush1.msra.mxu0 0.0
  %1441 = vmatprep.subr.mxu0 0.0
  %1442 = vmatpush1.msra.mxu0 0.0
  %1443 = vmatprep.subr.mxu0 0.0
  %1444 = vmatpush1.msra.mxu0 0.0
  %1445 = vmatprep.subr.mxu0 0.0
  %1446 = vmatpush1.msra.mxu0 0.0
  %1447 = vmatprep.subr.mxu0 0.0
  %1448 = vmatpush1.msra.mxu0 0.0
  %1449 = vmatprep.subr.mxu0 0.0
  %1450 = vmatpush1.msra.mxu0 0.0
  %1451 = vmatprep.subr.mxu0 0.0
  %1452 = vmatpush1.msra.mxu0 0.0
  %1453 = vmatprep.subr.mxu0 0.0
  %1454 = vmatpush1.msra.mxu0 0.0
  %1455 = vmatprep.subr.mxu0 0.0
  %1456 = vmatpush1.msra.mxu0 0.0
  %1457 = vmatprep.mubr.f32.mxu0 0.0
  %1458 = vmatmul.mubr.f32.gmra.mrb[0].mxu0 %v1391
  %v1459 = vpop.f32.mrb[0].mxu0
  %v1460 = vadd.f32 %v1388, %v1459
  %v1461 = vpop.f32.mrb[0].mxu0
  %1462 = vdwg.mxu0
  %v1463 = vtanh.pop %v1460
  %1465 = vrot.lane.b32.xlu0 %v1463, 32
  %v1466 = vpop.permute.xlu0 %1465
  %1468 = vst.msk [vmem:[#allocation4] sm:$0xff] %vm203, %v1466
  %s1469 = scalar_lea.vmem [#allocation5], 48
  %1470 = vst.msk [vmem:[%s1469] sm:$0xff] %vm186, %v1463
  %s1471 = scalar_lea.vmem [#allocation2], 56
  %v1472 = vld [vmem:[%s1471] sm:$0xff]
  %v1473 = vld [vmem:[#allocation3] sm:$0xff]
  %v1474 = vld [vmem:[%s3] sm:$0xff]
  %v1475 = vld [vmem:[%s3 + $0x8] sm:$0xff]
  %v1476 = vld [vmem:[%s3 + $0x10] sm:$0xff]
  %v1477 = vld [vmem:[%s3 + $0x18] sm:$0xff]
  %v1479 = vsel %vm186, %v1473, 0
  %1481 = vmatprep.subr.mxu0 0.0
  %1482 = vmatpush1.msra.mxu0 %v1474
  %1483 = vmatprep.subr.mxu0 0.0
  %1484 = vmatpush1.msra.mxu0 %v1475
  %1485 = vmatprep.subr.mxu0 0.0
  %1486 = vmatpush1.msra.mxu0 %v1476
  %1487 = vmatprep.subr.mxu0 0.0
  %1488 = vmatpush1.msra.mxu0 %v1477
  %1489 = vmatprep.subr.mxu0 0.0
  %1490 = vmatpush1.msra.mxu0 0.0
  %1491 = vmatprep.subr.mxu0 0.0
  %1492 = vmatpush1.msra.mxu0 0.0
  %1493 = vmatprep.subr.mxu0 0.0
  %1494 = vmatpush1.msra.mxu0 0.0
  %1495 = vmatprep.subr.mxu0 0.0
  %1496 = vmatpush1.msra.mxu0 0.0
  %1497 = vmatprep.subr.mxu0 0.0
  %1498 = vmatpush1.msra.mxu0 0.0
  %1499 = vmatprep.subr.mxu0 0.0
  %1500 = vmatpush1.msra.mxu0 0.0
  %1501 = vmatprep.subr.mxu0 0.0
  %1502 = vmatpush1.msra.mxu0 0.0
  %1503 = vmatprep.subr.mxu0 0.0
  %1504 = vmatpush1.msra.mxu0 0.0
  %1505 = vmatprep.subr.mxu0 0.0
  %1506 = vmatpush1.msra.mxu0 0.0
  %1507 = vmatprep.subr.mxu0 0.0
  %1508 = vmatpush1.msra.mxu0 0.0
  %1509 = vmatprep.subr.mxu0 0.0
  %1510 = vmatpush1.msra.mxu0 0.0
  %1511 = vmatprep.subr.mxu0 0.0
  %1512 = vmatpush1.msra.mxu0 0.0
  %1513 = vmatprep.subr.mxu0 0.0
  %1514 = vmatpush1.msra.mxu0 0.0
  %1515 = vmatprep.subr.mxu0 0.0
  %1516 = vmatpush1.msra.mxu0 0.0
  %1517 = vmatprep.subr.mxu0 0.0
  %1518 = vmatpush1.msra.mxu0 0.0
  %1519 = vmatprep.subr.mxu0 0.0
  %1520 = vmatpush1.msra.mxu0 0.0
  %1521 = vmatprep.subr.mxu0 0.0
  %1522 = vmatpush1.msra.mxu0 0.0
  %1523 = vmatprep.subr.mxu0 0.0
  %1524 = vmatpush1.msra.mxu0 0.0
  %1525 = vmatprep.subr.mxu0 0.0
  %1526 = vmatpush1.msra.mxu0 0.0
  %1527 = vmatprep.subr.mxu0 0.0
  %1528 = vmatpush1.msra.mxu0 0.0
  %1529 = vmatprep.subr.mxu0 0.0
  %1530 = vmatpush1.msra.mxu0 0.0
  %1531 = vmatprep.subr.mxu0 0.0
  %1532 = vmatpush1.msra.mxu0 0.0
  %1533 = vmatprep.subr.mxu0 0.0
  %1534 = vmatpush1.msra.mxu0 0.0
  %1535 = vmatprep.subr.mxu0 0.0
  %1536 = vmatpush1.msra.mxu0 0.0
  %1537 = vmatprep.subr.mxu0 0.0
  %1538 = vmatpush1.msra.mxu0 0.0
  %1539 = vmatprep.subr.mxu0 0.0
  %1540 = vmatpush1.msra.mxu0 0.0
  %1541 = vmatprep.subr.mxu0 0.0
  %1542 = vmatpush1.msra.mxu0 0.0
  %1543 = vmatprep.subr.mxu0 0.0
  %1544 = vmatpush1.msra.mxu0 0.0
  %1545 = vmatprep.mubr.f32.mxu0 0.0
  %1546 = vmatmul.mubr.f32.gmra.mrb[0].mxu0 %v1479
  %v1547 = vpop.f32.mrb[0].mxu0
  %v1548 = vadd.f32 0.0, %v1547
  %v1549 = vpop.f32.mrb[0].mxu0
  %1550 = vdwg.mxu0
  %v1551 = vadd.f32 %v1472, %v1548
  %v1552 = vtanh.pop %v1551
  %1553 = vst.msk [vmem:[#allocation3] sm:$0xff] %vm186, %v1552
  %1554 = vst.msk [vmem:[#allocation4] sm:$0xff] %vm186, %v1552
  %v1555 = vld [vmem:[#allocation4] sm:$0xff]
  %v1556 = vld [vmem:[%s5] sm:$0xff]
  %v1557 = vld [vmem:[%s5 + $0x8] sm:$0xff]
  %v1558 = vld [vmem:[%s5 + $0x10] sm:$0xff]
  %v1559 = vld [vmem:[%s5 + $0x18] sm:$0xff]
  %v1560 = vld [vmem:[%s5 + $0x20] sm:$0xff]
  %v1561 = vld [vmem:[%s5 + $0x28] sm:$0xff]
  %v1562 = vld [vmem:[%s5 + $0x30] sm:$0xff]
  %v1563 = vld [vmem:[%s5 + $0x38] sm:$0xff]
  %v1564 = vld [vmem:[%s6] sm:$0x1]
  %v1566 = vlaneseq
  %v1567 = vshrl.u32 %v1566, 7
  %v1568 = vsub.s32 0, %v1567
  %v1569 = vrot.slane %v1564, %v1568
  %v1572 = vsel %vm304, %v1555, 0
  %1574 = vmatprep.subr.mxu0 0.0
  %1575 = vmatpush1.msra.mxu0 %v1556
  %1576 = vmatprep.subr.mxu0 0.0
  %1577 = vmatpush1.msra.mxu0 %v1557
  %1578 = vmatprep.subr.mxu0 0.0
  %1579 = vmatpush1.msra.mxu0 %v1558
  %1580 = vmatprep.subr.mxu0 0.0
  %1581 = vmatpush1.msra.mxu0 %v1559
  %1582 = vmatprep.subr.mxu0 0.0
  %1583 = vmatpush1.msra.mxu0 %v1560
  %1584 = vmatprep.subr.mxu0 0.0
  %1585 = vmatpush1.msra.mxu0 %v1561
  %1586 = vmatprep.subr.mxu0 0.0
  %1587 = vmatpush1.msra.mxu0 %v1562
  %1588 = vmatprep.subr.mxu0 0.0
  %1589 = vmatpush1.msra.mxu0 %v1563
  %1590 = vmatprep.subr.mxu0 0.0
  %1591 = vmatpush1.msra.mxu0 0.0
  %1592 = vmatprep.subr.mxu0 0.0
  %1593 = vmatpush1.msra.mxu0 0.0
  %1594 = vmatprep.subr.mxu0 0.0
  %1595 = vmatpush1.msra.mxu0 0.0
  %1596 = vmatprep.subr.mxu0 0.0
  %1597 = vmatpush1.msra.mxu0 0.0
  %1598 = vmatprep.subr.mxu0 0.0
  %1599 = vmatpush1.msra.mxu0 0.0
  %1600 = vmatprep.subr.mxu0 0.0
  %1601 = vmatpush1.msra.mxu0 0.0
  %1602 = vmatprep.subr.mxu0 0.0
  %1603 = vmatpush1.msra.mxu0 0.0
  %1604 = vmatprep.subr.mxu0 0.0
  %1605 = vmatpush1.msra.mxu0 0.0
  %1606 = vmatprep.subr.mxu0 0.0
  %1607 = vmatpush1.msra.mxu0 0.0
  %1608 = vmatprep.subr.mxu0 0.0
  %1609 = vmatpush1.msra.mxu0 0.0
  %1610 = vmatprep.subr.mxu0 0.0
  %1611 = vmatpush1.msra.mxu0 0.0
  %1612 = vmatprep.subr.mxu0 0.0
  %1613 = vmatpush1.msra.mxu0 0.0
  %1614 = vmatprep.subr.mxu0 0.0
  %1615 = vmatpush1.msra.mxu0 0.0
  %1616 = vmatprep.subr.mxu0 0.0
  %1617 = vmatpush1.msra.mxu0 0.0
  %1618 = vmatprep.subr.mxu0 0.0
  %1619 = vmatpush1.msra.mxu0 0.0
  %1620 = vmatprep.subr.mxu0 0.0
  %1621 = vmatpush1.msra.mxu0 0.0
  %1622 = vmatprep.subr.mxu0 0.0
  %1623 = vmatpush1.msra.mxu0 0.0
  %1624 = vmatprep.subr.mxu0 0.0
  %1625 = vmatpush1.msra.mxu0 0.0
  %1626 = vmatprep.subr.mxu0 0.0
  %1627 = vmatpush1.msra.mxu0 0.0
  %1628 = vmatprep.subr.mxu0 0.0
  %1629 = vmatpush1.msra.mxu0 0.0
  %1630 = vmatprep.subr.mxu0 0.0
  %1631 = vmatpush1.msra.mxu0 0.0
  %1632 = vmatprep.subr.mxu0 0.0
  %1633 = vmatpush1.msra.mxu0 0.0
  %1634 = vmatprep.subr.mxu0 0.0
  %1635 = vmatpush1.msra.mxu0 0.0
  %1636 = vmatprep.subr.mxu0 0.0
  %1637 = vmatpush1.msra.mxu0 0.0
  %1638 = vmatprep.mubr.f32.mxu0 0.0
  %1639 = vmatmul.mubr.f32.gmra.mrb[0].mxu0 %v1572
  %v1640 = vpop.f32.mrb[0].mxu0
  %v1641 = vadd.f32 %v1569, %v1640
  %v1642 = vpop.f32.mrb[0].mxu0
  %1643 = vdwg.mxu0
  %v1644 = vtanh.pop %v1641
  %1646 = vrot.lane.b32.xlu0 %v1644, 32
  %v1647 = vpop.permute.xlu0 %1646
  %1649 = vst.msk [vmem:[#allocation4] sm:$0xff] %vm203, %v1647
  %s1650 = scalar_lea.vmem [#allocation5], 56
  %1651 = vst.msk [vmem:[%s1650] sm:$0xff] %vm186, %v1644
  %v1652 = vld [vmem:[#allocation5] sm:$0xff]
  %v1653 = vld [vmem:[#allocation5 + $0x8] sm:$0xff]
  %v1654 = vld [vmem:[#allocation5 + $0x10] sm:$0xff]
  %v1655 = vld [vmem:[#allocation5 + $0x18] sm:$0xff]
  %v1656 = vld [vmem:[#allocation5 + $0x20] sm:$0xff]
  %v1657 = vld [vmem:[#allocation5 + $0x28] sm:$0xff]
  %v1658 = vld [vmem:[#allocation5 + $0x30] sm:$0xff]
  %v1659 = vld [vmem:[#allocation5 + $0x38] sm:$0xff]
  %v1660 = vld [vmem:[%s7] sm:$0x1]
  %v1662 = vlaneseq
  %v1663 = vshrl.u32 %v1662, 7
  %v1664 = vsub.s32 0, %v1663
  %v1665 = vrot.slane %v1660, %v1664
  %v1667 = vmul.f32 %v1652, %v1665
  %v1668 = vmul.f32 %v1653, %v1665
  %v1669 = vmul.f32 %v1654, %v1665
  %v1670 = vmul.f32 %v1655, %v1665
  %v1671 = vmul.f32 %v1656, %v1665
  %v1672 = vmul.f32 %v1657, %v1665
  %v1673 = vmul.f32 %v1658, %v1665
  %v1674 = vmul.f32 %v1659, %v1665
  %v1675 = vsel %vm186, %v1667, 0.0
  %1676 = vadd.xlane.f32.xlu0 %v1675
  %v1677 = vpop.xlane.xlu0 %1676
  %v1678 = vsel %vm186, %v1668, 0.0
  %1679 = vadd.xlane.f32.xlu0 %v1678
  %v1680 = vpop.xlane.xlu0 %1679
  %v1681 = vsel %vm186, %v1669, 0.0
  %1682 = vadd.xlane.f32.xlu0 %v1681
  %v1683 = vpop.xlane.xlu0 %1682
  %v1684 = vsel %vm186, %v1670, 0.0
  %1685 = vadd.xlane.f32.xlu0 %v1684
  %v1686 = vpop.xlane.xlu0 %1685
  %v1687 = vsel %vm186, %v1671, 0.0
  %1688 = vadd.xlane.f32.xlu0 %v1687
  %v1689 = vpop.xlane.xlu0 %1688
  %v1690 = vsel %vm186, %v1672, 0.0
  %1691 = vadd.xlane.f32.xlu0 %v1690
  %v1692 = vpop.xlane.xlu0 %1691
  %v1693 = vsel %vm186, %v1673, 0.0
  %1694 = vadd.xlane.f32.xlu0 %v1693
  %v1695 = vpop.xlane.xlu0 %1694
  %v1696 = vsel %vm186, %v1674, 0.0
  %1697 = vadd.xlane.f32.xlu0 %v1696
  %v1698 = vpop.xlane.xlu0 %1697
  %v1699 = vld [vmem:[#allocation6] sm:$0x1]
  %v1701 = vlaneseq
  %v1702 = vshrl.u32 %v1701, 7
  %v1703 = vsub.s32 0, %v1702
  %v1704 = vrot.slane %v1699, %v1703
  %v1706 = vadd.f32 %v1677, %v1704
  %v1707 = vadd.f32 %v1680, %v1704
  %v1708 = vadd.f32 %v1683, %v1704
  %v1709 = vadd.f32 %v1686, %v1704
  %v1710 = vadd.f32 %v1689, %v1704
  %v1711 = vadd.f32 %v1692, %v1704
  %v1712 = vadd.f32 %v1695, %v1704
  %v1713 = vadd.f32 %v1698, %v1704
  %vm1714 = vcmask 7168
  %1715 = vst.msk [vmem:[%s9] sm:$0xff] %vm1714, %v1706
  %1716 = vst.msk [vmem:[%s9 + $0x8] sm:$0xff] %vm1714, %v1707
  %1717 = vst.msk [vmem:[%s9 + $0x10] sm:$0xff] %vm1714, %v1708
  %1718 = vst.msk [vmem:[%s9 + $0x18] sm:$0xff] %vm1714, %v1709
  %1719 = vst.msk [vmem:[%s9 + $0x20] sm:$0xff] %vm1714, %v1710
  %1720 = vst.msk [vmem:[%s9 + $0x28] sm:$0xff] %vm1714, %v1711
  %1721 = vst.msk [vmem:[%s9 + $0x30] sm:$0xff] %vm1714, %v1712
  %1722 = vst.msk [vmem:[%s9 + $0x38] sm:$0xff] %vm1714, %v1713
  %v1723 = vld [vmem:[#allocation3] sm:$0xff]
  %1724 = vst.msk [vmem:[%s10] sm:$0xff] %vm186, %v1723
  %v1725 = vld [vmem:[#allocation4] sm:$0xff]
  %1727 = vrot.lane.b32.xlu0 %v1725, 96
  %v1728 = vpop.permute.xlu0 %1727
  %s1730 = scalar_lea.vmem %s10, 8
  %1731 = vst.msk [vmem:[%s1730] sm:$0xff] %vm186, %v1728
  // Predicated region
  $region38: #{rnn_forward.1} parent=0 // pred_check
    _
  $region39: #{rnn_forward.1} parent=0 // pred_check_branch
    %1733 = sbr.rel (0) target = $region41
  $region40: #{rnn_forward.1} parent=0 // pred_region
    _
  $region41: #{rnn_forward.1} parent=0 // pred_fallthru
    _
  // Predicated region
  $region42: #{rnn_forward.1} parent=0 // pred_check
    _
  $region43: #{rnn_forward.1} parent=0 // pred_check_branch
    %1735 = sbr.rel (0) target = $region45
  $region44: #{rnn_forward.1} parent=0 // pred_region
    _
  $region45: #{rnn_forward.1} parent=0 // pred_fallthru
    _
  // Predicated region
  $region46: #{rnn_forward.1} parent=0 // pred_check
    _
  $region47: #{rnn_forward.1} parent=0 // pred_check_branch
    %1737 = sbr.rel (0) target = $region49
  $region48: #{rnn_forward.1} parent=0 // pred_region
    _
  $region49: #{rnn_forward.1} parent=0 // pred_fallthru
    _
  // Predicated region
  $region50: #{rnn_forward.1} parent=0 // pred_check
    _
  $region51: #{rnn_forward.1} parent=0 // pred_check_branch
    %1739 = sbr.rel (0) target = $region53
  $region52: #{rnn_forward.1} parent=0 // pred_region
    _
  $region53: #{rnn_forward.1} parent=0 // pred_fallthru
    _

</llo_original>
